<compile_context>
chip_gen: v5e
topology: v5e:2x2
jax: 0.10.0
libtpu: 0.0.40
codegen_flags: <defaults>
</compile_context>

<pallas_src>
import functools

import jax
import jax.numpy as jnp
from jax.experimental import pallas as pl
from jax.experimental.pallas import tpu as pltpu


def _round_up(n, m):
    return (n + m - 1) // m * m


def _clamp_vmem(nbytes):
    # Generous headroom over the measured footprint, capped at 48 MiB so the
    # double-buffered blocks stay inside v7x's 64 MiB physical VMEM
    # (v5e/v6e have 128 MiB and could go higher).
    return int(min(max(2 * nbytes, 32 * 1024 * 1024), 48 * 1024 * 1024))


def _pick_ht(H, W, C_in, C_pad, budget=2 * 1024 * 1024):
    """Rows per conv strip.

    Largest divisor of H whose per-strip live intermediates (bf16 im2col patch
    + f32 dot result + f32 transposed result) fit `budget`; prefers strips
    whose flattened length Ht*W is a multiple of 128 (lane-aligned stores) and
    >= 2 strips per image (keeps store DMAs overlapped with MXU work).
    """
    row_bytes = W * (9 * C_in * 2 + 2 * C_pad * 4)
    divisors = [d for d in range(1, H + 1) if H % d == 0]
    fitting = [d for d in divisors if d * row_bytes <= budget] or [1]
    aligned = [d for d in fitting if (d * W) % 128 == 0]
    multi = [d for d in aligned if d < H]
    if multi:
        return max(multi)
    if aligned:
        return max(aligned)
    return max(fitting)


# ---------------------------------------------------------------------------
# Kernel 1: gate pre-activation per sample
#   s = mean_{H,W} |x|          (reads the bf16 padded NHWC x; halo is zero)
#   g = relu(s @ Wg^T + bg)
# ---------------------------------------------------------------------------
def _gate_kernel(xp_ref, wgt_ref, bg_ref, g_ref, *, inv_hw):
    # xp_ref: (Hp, Wp, C_in) bf16; wgt_ref: (C_in, C_out) f32; bg_ref: (1, C_out)
    # g_ref : (1, C_out) f32
    xa = jnp.abs(xp_ref[...].astype(jnp.float32))
    s = jnp.sum(xa, axis=(0, 1), keepdims=True).reshape(1, -1) * inv_hw
    g = jnp.dot(s, wgt_ref[...], preferred_element_type=jnp.float32) + bg_ref[...]
    g_ref[...] = jnp.maximum(g, 0.0)


def gate_preact(x_pad, gate_wT, gate_b, H, W):
    B, Hp, Wp, C_in = x_pad.shape
    C_out = gate_wT.shape[1]
    kernel = functools.partial(_gate_kernel, inv_hw=1.0 / (H * W))
    xpad_bytes = Hp * Wp * C_in * 2
    g = pl.pallas_call(
        kernel,
        out_shape=jax.ShapeDtypeStruct((B, 1, C_out), jnp.float32),
        grid=(B,),
        in_specs=[
            pl.BlockSpec((None, Hp, Wp, C_in), lambda b: (b, 0, 0, 0)),
            pl.BlockSpec((C_in, C_out), lambda b: (0, 0)),
            pl.BlockSpec((1, C_out), lambda b: (0, 0)),
        ],
        out_specs=pl.BlockSpec((None, 1, C_out), lambda b: (b, 0, 0)),
        compiler_params=pltpu.CompilerParams(
            dimension_semantics=("parallel",),      # both TCs on v7x when B>=2
            vmem_limit_bytes=_clamp_vmem(4 * xpad_bytes),
        ),
    )(x_pad, gate_wT, gate_b.reshape(1, C_out))
    return g.reshape(B, C_out)


# ---------------------------------------------------------------------------
# Kernel 2: 3x3 conv (stride 1, pad 1) -> BN(eval)*gate (folded scale/shift)
#           -> optional ReLU, written channel-major (NCHW) in f32.
# One grid step = one image; strips of Ht rows are processed in a pl.loop so
# the live im2col / dot intermediates stay bounded.
# ---------------------------------------------------------------------------
def _conv_bn_gate_kernel(xp_ref, w_ref, sc_ref, sh_ref, o_ref, *,
                         H, W, Ht, C_out, use_relu, fuse_k):
    # xp_ref: (Hp, Wp, C_in)  bf16 zero-padded NHWC image (one sample)
    # w_ref:  (9*C_in, C_pad) bf16 im2col weight slab (zero-padded columns)
    # sc_ref: (1, C_pad)      f32 per-sample scale = BN_scale * gate_t
    # sh_ref: (1, C_pad)      f32 per-sample shift = BN_shift * gate_t
    # o_ref:  (C_out, H*W)    f32 channel-major output (reshapes to NCHW free)
    C_in = xp_ref.shape[-1]
    C_pad = w_ref.shape[-1]
    Ms = Ht * W
    sc = sc_ref[...]
    sh = sh_ref[...]

    @pl.loop(0, H // Ht)
    def _strip(s):
        h0 = s * Ht
        if fuse_k:
            # Sublane-aligned C_in: one fused K=9*C_in contraction (the lane
            # concat is a cheap block copy in this case).
            wins = []
            for dh in range(3):
                rows = xp_ref[pl.ds(h0 + dh, Ht), :, :]          # (Ht, Wp, C_in)
                for dw in range(3):
                    wins.append(rows[:, dw:dw + W, :])           # (Ht, W, C_in)
            patch = jnp.concatenate(wins, axis=-1).reshape(Ms, 9 * C_in)
            y = jnp.dot(patch, w_ref[...], preferred_element_type=jnp.float32)
        else:
            # Tiny C_in: nine accumulating K=C_in taps avoid the lane-interleave
            # concat (pure relayout overhead when C_in << 128).
            y = jnp.zeros((Ms, C_pad), jnp.float32)
            for dh in range(3):
                rows = xp_ref[pl.ds(h0 + dh, Ht), :, :]          # (Ht, Wp, C_in)
                for dw in range(3):
                    win = rows[:, dw:dw + W, :].reshape(Ms, C_in)
                    tap = dh * 3 + dw
                    y = y + jnp.dot(win, w_ref[tap * C_in:(tap + 1) * C_in, :],
                                    preferred_element_type=jnp.float32)

        y = y * sc + sh                       # BN (eval) with folded gate t
        if use_relu:
            y = jnp.maximum(y, 0.0)

        # Channel-major store: (Ms, C_pad) -> (C_pad, Ms), keep real channels.
        yt = jnp.transpose(y)
        off = s * Ms
        if Ms % 128 == 0:
            off = pl.multiple_of(off, 128)
        o_ref[:, pl.ds(off, Ms)] = yt[:C_out, :].astype(o_ref.dtype)


def conv_bn_gate(x_pad, w_col, scale_b, shift_b, H, W, C_out, *, use_relu):
    B, Hp, Wp, C_in = x_pad.shape
    C_pad = w_col.shape[-1]
    Ht = _pick_ht(H, W, C_in, C_pad)
    assert H % Ht == 0
    fuse_k = (C_in % 8 == 0)

    kernel = functools.partial(
        _conv_bn_gate_kernel, H=H, W=W, Ht=Ht, C_out=C_out,
        use_relu=use_relu, fuse_k=fuse_k)

    # Footprint-derived VMEM request (double-buffered blocks + live strip).
    xpad_bytes = Hp * Wp * C_in * 2
    out_bytes = C_out * H * W * 4
    w_bytes = 9 * C_in * C_pad * 2
    strip_bytes = Ht * W * (9 * C_in * 2 + 2 * C_pad * 4)
    footprint = 2 * xpad_bytes + 2 * out_bytes + w_bytes + strip_bytes

    # TODO(synk): for very large images the full padded image block itself
    # would need halo'd row tiling (manual DMA); fine for typical FBS layers.
    return pl.pallas_call(
        kernel,
        out_shape=jax.ShapeDtypeStruct((B, C_out, H * W), jnp.float32),
        grid=(B,),
        in_specs=[
            pl.BlockSpec((None, Hp, Wp, C_in), lambda b: (b, 0, 0, 0)),
            pl.BlockSpec((9 * C_in, C_pad), lambda b: (0, 0)),
            pl.BlockSpec((None, 1, C_pad), lambda b: (b, 0, 0)),
            pl.BlockSpec((None, 1, C_pad), lambda b: (b, 0, 0)),
        ],
        out_specs=pl.BlockSpec((None, C_out, H * W), lambda b: (b, 0, 0)),
        compiler_params=pltpu.CompilerParams(
            dimension_semantics=("parallel",),
            vmem_limit_bytes=_clamp_vmem(footprint),
        ),
    )(x_pad, w_col, scale_b, shift_b)


# ---------------------------------------------------------------------------
# FBS forward (eval mode)
# ---------------------------------------------------------------------------
def fbs_forward(x_nchw, params, *, out_channels, stride=1, rate=1.0,
                use_relu=False, eps=1e-5):
    assert stride == 1  # TODO(synk): strided conv path not implemented.
    B, C_in, H, W = x_nchw.shape
    C_out = out_channels
    # MXU-wide N for the conv dot; padded columns are sliced off in-kernel
    # before the channel-major store, so there is no HBM write amplification.
    # TODO(synk): pad N to 256 on v6e/v7x when C_out > 128 (full MXU width).
    C_pad = _round_up(C_out, 128)

    # Single fused XLA pass: NCHW->NHWC transpose + 1px zero halo + bf16 cast.
    # Both Pallas kernels consume this bf16 tensor, so x is read in f32 once.
    # TODO(synk): this pass could itself become a Pallas kernel that also
    # emits the |x| statistic, saving one more bf16 read of x.
    x_pad = jnp.pad(
        jnp.transpose(x_nchw, (0, 2, 3, 1)).astype(jnp.bfloat16),
        ((0, 0), (1, 1), (1, 1), (0, 0)))

    # --- gate path ------------------------------------------------------------
    k = int(C_out * (1.0 - rate))
    if k > 0:
        g = gate_preact(x_pad, params["gate_wT"], params["gate_b"], H, W)
        # Glue (tiny per-sample op): zero the k smallest gates, renormalize.
        _, idx = jax.lax.top_k(-g, k)
        bidx = jnp.arange(B)[:, None]
        t = g.at[bidx, idx].set(0.0)
        t = t / jnp.sum(t, axis=1, keepdims=True) * C_out      # (B, C_out) >= 0
        # TODO(synk): matches the reference exactly, including NaN if an entire
        # gate row is suppressed to zero (degenerate all-zero ReLU output).
    else:
        t = jnp.ones((B, C_out), jnp.float32)

    # --- conv path: fold BN (eval) and the gate multiplier into one per-sample
    # scale/shift (valid since t >= 0 commutes with ReLU). ----------------------
    bn_scale = params["bn_gamma"] / jnp.sqrt(params["bn_var"] + eps)
    bn_shift = params["bn_beta"] - params["bn_mean"] * bn_scale
    scale_b = bn_scale[None, :] * t                             # (B, C_out)
    shift_b = bn_shift[None, :] * t
    pad_c = ((0, 0), (0, C_pad - C_out))
    scale_b = jnp.pad(scale_b, pad_c).reshape(B, 1, C_pad)
    shift_b = jnp.pad(shift_b, pad_c).reshape(B, 1, C_pad)

    # HWIO conv weights -> (9*C_in, C_pad) im2col slab, bf16, zero-padded cols.
    w_col = params["conv_w"].reshape(9 * C_in, C_out).astype(jnp.bfloat16)
    w_col = jnp.pad(w_col, ((0, 0), (0, C_pad - C_out)))

    y = conv_bn_gate(x_pad, w_col, scale_b, shift_b, H, W, C_out,
                     use_relu=use_relu)
    return y.reshape(B, C_out, H, W)          # channel-major: already NCHW


# ---------------------------------------------------------------------------
# Pure-JAX reference (for verification)
# ---------------------------------------------------------------------------
def reference_forward(x_nchw, params, *, out_channels, rate, use_relu, eps=1e-5):
    x = jnp.transpose(x_nchw, (0, 2, 3, 1))
    y = jax.lax.conv_general_dilated(
        x, params["conv_w"], window_strides=(1, 1), padding=((1, 1), (1, 1)),
        dimension_numbers=("NHWC", "HWIO", "NHWC"),
        precision=jax.lax.Precision.HIGHEST)
    scale = params["bn_gamma"] / jnp.sqrt(params["bn_var"] + eps)
    shift = params["bn_beta"] - params["bn_mean"] * scale
    y = y * scale + shift
    if use_relu:
        y = jnp.maximum(y, 0.0)
    k = int(out_channels * (1.0 - rate))
    if k > 0:
        # Mirror the kernel's bf16 activation feed for the |x| statistic so the
        # top-k channel selection is compared like-for-like (a near-tie under
        # tiny rounding differences would otherwise make the check flaky).
        xq = x.astype(jnp.bfloat16).astype(jnp.float32)
        s = jnp.mean(jnp.abs(xq), axis=(1, 2))
        g = jnp.maximum(
            jnp.dot(s, params["gate_wT"], precision=jax.lax.Precision.HIGHEST)
            + params["gate_b"], 0.0)
        _, idx = jax.lax.top_k(-g, k)
        bidx = jnp.arange(g.shape[0])[:, None]
        t = g.at[bidx, idx].set(0.0)
        t = t / jnp.sum(t, axis=1, keepdims=True) * out_channels
        y = y * t[:, None, None, :]
    return jnp.transpose(y, (0, 3, 1, 2))


if __name__ == "__main__":
    B, C_in, H, W = 2, 4, 16, 16
    C_out = 8
    rate = 0.5            # -> k = 4 channels suppressed per sample
    use_relu = True

    key = jax.random.PRNGKey(0)
    k_x, k_cw, k_gw = jax.random.split(key, 3)

    x = jax.random.normal(k_x, (B, C_in, H, W), jnp.float32)     # PyTorch NCHW

    params = {
        # Conv2d(in, out, 3, padding=1, bias=False) weight, stored HWIO.
        "conv_w": jax.random.normal(k_cw, (3, 3, C_in, C_out), jnp.float32) * 0.1,
        # nn.Linear(in, out): kaiming_normal_ weight (std = sqrt(2/fan_in)),
        # bias = 1. Stored transposed (C_in, C_out) so the kernel does s @ Wg^T.
        "gate_wT": jax.random.normal(k_gw, (C_in, C_out), jnp.float32)
                   * jnp.sqrt(2.0 / C_in),
        "gate_b": jnp.ones((C_out,), jnp.float32),
        # BatchNorm2d defaults (eval mode).
        "bn_gamma": jnp.ones((C_out,), jnp.float32),
        "bn_beta": jnp.zeros((C_out,), jnp.float32),
        "bn_mean": jnp.zeros((C_out,), jnp.float32),
        "bn_var": jnp.ones((C_out,), jnp.float32),
    }

    fwd = jax.jit(functools.partial(fbs_forward, out_channels=C_out, stride=1,
                                    rate=rate, use_relu=use_relu))
    out = jax.block_until_ready(fwd(x, params))

    ref = reference_forward(x, params, out_channels=C_out, rate=rate,
                            use_relu=use_relu)
    assert out.shape == (B, C_out, H, W), out.shape
    # bf16 MXU inputs (f32 accumulation) vs. a full-f32 reference conv.
    assert jnp.allclose(out, ref, atol=5e-2, rtol=5e-2), float(
        jnp.max(jnp.abs(out - ref)))

    print("KERNEL_OK")
</pallas_src>

<mosaic_0001>
module attributes {stable_mosaic.version = 11 : i64} {
  func.func @_gate_kernel(%arg0: i32, %arg1: memref<1x18x18x4xbf16, #tpu.memory_space<vmem>>, %arg2: memref<4x8xf32, #tpu.memory_space<vmem>>, %arg3: memref<1x8xf32, #tpu.memory_space<vmem>>, %arg4: memref<1x1x8xf32, #tpu.memory_space<vmem>>) attributes {dimension_semantics = [#tpu.dimension_semantics<parallel>], iteration_bounds = array<i64: 2>, scalar_prefetch = 0 : i64, scratch_operands = 0 : i64, tpu.core_type = #tpu.core_type<tc>, window_params = [{transform_indices = @transform_0, window_bounds = array<i64: 1, 18, 18, 4>}, {pipeline_mode = #tpu.pipeline_mode<synchronous>, transform_indices = @transform_1, window_bounds = array<i64: 4, 8>}, {pipeline_mode = #tpu.pipeline_mode<synchronous>, transform_indices = @transform_2, window_bounds = array<i64: 1, 8>}, {transform_indices = @transform_3, window_bounds = array<i64: 1, 1, 8>}]} {
    %c0 = arith.constant 0 : index
    %c0_0 = arith.constant 0 : index
    %c0_1 = arith.constant 0 : index
    %c0_2 = arith.constant 0 : index
    %0 = vector.load %arg1[%c0, %c0_0, %c0_1, %c0_2] : memref<1x18x18x4xbf16, #tpu.memory_space<vmem>>, vector<1x18x18x4xbf16>
    %1 = vector.shape_cast %0 : vector<1x18x18x4xbf16> to vector<18x18x4xbf16>
    %2 = arith.extf %1 : vector<18x18x4xbf16> to vector<18x18x4xf32>
    %3 = math.absf %2 : vector<18x18x4xf32>
    %cst = arith.constant dense<0.000000e+00> : vector<4xf32>
    %4 = vector.multi_reduction <add>, %3, %cst [0, 1] : vector<18x18x4xf32> to vector<4xf32>
    %5 = vector.shape_cast %4 : vector<4xf32> to vector<1x1x4xf32>
    %6 = vector.shape_cast %5 : vector<1x1x4xf32> to vector<1x4xf32>
    %cst_3 = arith.constant 3.906250e-03 : f32
    %7 = vector.broadcast %cst_3 : f32 to vector<1x4xf32>
    %8 = arith.mulf %6, %7 : vector<1x4xf32>
    %c0_4 = arith.constant 0 : index
    %c0_5 = arith.constant 0 : index
    %9 = vector.load %arg2[%c0_4, %c0_5] : memref<4x8xf32, #tpu.memory_space<vmem>>, vector<4x8xf32>
    %cst_6 = arith.constant dense<0.000000e+00> : vector<1x8xf32>
    %10 = tpu.matmul %8, %9, %cst_6 {dimension_numbers = #tpu.dot_dimension_numbers<[1], [0], [0], [1], [0, 0, 1, 1], [], []>} : vector<1x4xf32>, vector<4x8xf32>, vector<1x8xf32> -> vector<1x8xf32>
    %c0_7 = arith.constant 0 : index
    %c0_8 = arith.constant 0 : index
    %11 = vector.load %arg3[%c0_7, %c0_8] : memref<1x8xf32, #tpu.memory_space<vmem>>, vector<1x8xf32>
    %12 = arith.addf %10, %11 : vector<1x8xf32>
    %cst_9 = arith.constant 0.000000e+00 : f32
    %13 = vector.broadcast %cst_9 : f32 to vector<1x8xf32>
    %14 = arith.maximumf %12, %13 : vector<1x8xf32>
    %c0_10 = arith.constant 0 : index
    %c0_11 = arith.constant 0 : index
    %c0_12 = arith.constant 0 : index
    %15 = vector.load %arg4[%c0_10, %c0_11, %c0_12] : memref<1x1x8xf32, #tpu.memory_space<vmem>>, vector<1x1x8xf32>
    %16 = vector.shape_cast %15 : vector<1x1x8xf32> to vector<1x8xf32>
    %17 = vector.shape_cast %14 : vector<1x8xf32> to vector<1x1x8xf32>
    tpu.vector_store %arg4[%c0_10, %c0_11, %c0_12], %17 {strides = array<i32>} : memref<1x1x8xf32, #tpu.memory_space<vmem>>, vector<1x1x8xf32>,
    return
  }
  func.func @transform_0(%arg0: i32) -> (i32, i32, i32, i32) {
    %c0_i32 = arith.constant 0 : i32
    %c0_i32_0 = arith.constant 0 : i32
    %c0_i32_1 = arith.constant 0 : i32
    %c0_i32_2 = arith.constant 0 : i32
    return %arg0, %c0_i32, %c0_i32_0, %c0_i32_1 : i32, i32, i32, i32
  }
  func.func @transform_1(%arg0: i32) -> (i32, i32) {
    %c0_i32 = arith.constant 0 : i32
    %c0_i32_0 = arith.constant 0 : i32
    %c0_i32_1 = arith.constant 0 : i32
    return %c0_i32, %c0_i32_0 : i32, i32
  }
  func.func @transform_2(%arg0: i32) -> (i32, i32) {
    %c0_i32 = arith.constant 0 : i32
    %c0_i32_0 = arith.constant 0 : i32
    %c0_i32_1 = arith.constant 0 : i32
    return %c0_i32, %c0_i32_0 : i32, i32
  }
  func.func @transform_3(%arg0: i32) -> (i32, i32, i32) {
    %c0_i32 = arith.constant 0 : i32
    %c0_i32_0 = arith.constant 0 : i32
    %c0_i32_1 = arith.constant 0 : i32
    return %arg0, %c0_i32, %c0_i32_0 : i32, i32, i32
  }
}

module attributes {stable_mosaic.version = 11 : i64} {
  func.func @_conv_bn_gate_kernel(%arg0: i32, %arg1: memref<1x18x18x4xbf16, #tpu.memory_space<vmem>>, %arg2: memref<36x128xbf16, #tpu.memory_space<vmem>>, %arg3: memref<1x1x128xf32, #tpu.memory_space<vmem>>, %arg4: memref<1x1x128xf32, #tpu.memory_space<vmem>>, %arg5: memref<1x8x256xf32, #tpu.memory_space<vmem>>) attributes {dimension_semantics = [#tpu.dimension_semantics<parallel>], iteration_bounds = array<i64: 2>, scalar_prefetch = 0 : i64, scratch_operands = 0 : i64, tpu.core_type = #tpu.core_type<tc>, window_params = [{transform_indices = @transform_0, window_bounds = array<i64: 1, 18, 18, 4>}, {pipeline_mode = #tpu.pipeline_mode<synchronous>, transform_indices = @transform_1, window_bounds = array<i64: 36, 128>}, {transform_indices = @transform_2, window_bounds = array<i64: 1, 1, 128>}, {transform_indices = @transform_3, window_bounds = array<i64: 1, 1, 128>}, {transform_indices = @transform_4, window_bounds = array<i64: 1, 8, 256>}]} {
    %c0 = arith.constant 0 : index
    %c0_0 = arith.constant 0 : index
    %c0_1 = arith.constant 0 : index
    %0 = vector.load %arg3[%c0, %c0_0, %c0_1] : memref<1x1x128xf32, #tpu.memory_space<vmem>>, vector<1x1x128xf32>
    %1 = vector.shape_cast %0 : vector<1x1x128xf32> to vector<1x128xf32>
    %c0_2 = arith.constant 0 : index
    %c0_3 = arith.constant 0 : index
    %c0_4 = arith.constant 0 : index
    %2 = vector.load %arg4[%c0_2, %c0_3, %c0_4] : memref<1x1x128xf32, #tpu.memory_space<vmem>>, vector<1x1x128xf32>
    %3 = vector.shape_cast %2 : vector<1x1x128xf32> to vector<1x128xf32>
    %c0_i32 = arith.constant 0 : i32
    %c2_i32 = arith.constant 2 : i32
    %4 = arith.addi %c0_i32, %c2_i32 : i32
    %c1_i32 = arith.constant 1 : i32
    scf.for %arg6 = %c0_i32 to %4 step %c1_i32  : i32 {
      %c1_i32_6 = arith.constant 1 : i32
      %5 = arith.muli %arg6, %c1_i32_6 : i32
      %c0_i32_7 = arith.constant 0 : i32
      %6 = arith.addi %c0_i32_7, %5 : i32
      %c8_i32 = arith.constant 8 : i32
      %7 = arith.muli %6, %c8_i32 : i32
      %cst = arith.constant 0.000000e+00 : f32
      %8 = vector.broadcast %cst : f32 to vector<128x128xf32>
      %c0_i32_8 = arith.constant 0 : i32
      %9 = arith.addi %7, %c0_i32_8 : i32
      %c0_9 = arith.constant 0 : index
      %10 = arith.index_cast %9 : i32 to index
      %c0_10 = arith.constant 0 : index
      %c0_11 = arith.constant 0 : index
      %11 = vector.load %arg1[%c0_9, %10, %c0_10, %c0_11] : memref<1x18x18x4xbf16, #tpu.memory_space<vmem>>, vector<1x8x18x4xbf16>
      %12 = vector.shape_cast %11 : vector<1x8x18x4xbf16> to vector<8x18x4xbf16>
      %13 = vector.extract_strided_slice %12 {offsets = [0, 0, 0], sizes = [8, 16, 4], strides = [1, 1, 1]} : vector<8x18x4xbf16> to vector<8x16x4xbf16>
      %14 = vector.shape_cast %13 : vector<8x16x4xbf16> to vector<128x4xbf16>
      %c0_12 = arith.constant 0 : index
      %c0_13 = arith.constant 0 : index
      %15 = vector.load %arg2[%c0_12, %c0_13] : memref<36x128xbf16, #tpu.memory_space<vmem>>, vector<4x128xbf16>
      %cst_14 = arith.constant dense<0.000000e+00> : vector<128x128xf32>
      %16 = tpu.matmul %14, %15, %cst_14 {dimension_numbers = #tpu.dot_dimension_numbers<[1], [0], [0], [1], [0, 0, 1, 1], [], []>} : vector<128x4xbf16>, vector<4x128xbf16>, vector<128x128xf32> -> vector<128x128xf32>
      %17 = arith.addf %8, %16 : vector<128x128xf32>
      %18 = vector.extract_strided_slice %12 {offsets = [0, 1, 0], sizes = [8, 16, 4], strides = [1, 1, 1]} : vector<8x18x4xbf16> to vector<8x16x4xbf16>
      %19 = vector.shape_cast %18 : vector<8x16x4xbf16> to vector<128x4xbf16>
      %c4 = arith.constant 4 : index
      %c0_15 = arith.constant 0 : index
      %20 = vector.load %arg2[%c4, %c0_15] : memref<36x128xbf16, #tpu.memory_space<vmem>>, vector<4x128xbf16>
      %cst_16 = arith.constant dense<0.000000e+00> : vector<128x128xf32>
      %21 = tpu.matmul %19, %20, %cst_16 {dimension_numbers = #tpu.dot_dimension_numbers<[1], [0], [0], [1], [0, 0, 1, 1], [], []>} : vector<128x4xbf16>, vector<4x128xbf16>, vector<128x128xf32> -> vector<128x128xf32>
      %22 = arith.addf %17, %21 : vector<128x128xf32>
      %23 = vector.extract_strided_slice %12 {offsets = [0, 2, 0], sizes = [8, 16, 4], strides = [1, 1, 1]} : vector<8x18x4xbf16> to vector<8x16x4xbf16>
      %24 = vector.shape_cast %23 : vector<8x16x4xbf16> to vector<128x4xbf16>
      %c8 = arith.constant 8 : index
      %c0_17 = arith.constant 0 : index
      %25 = vector.load %arg2[%c8, %c0_17] : memref<36x128xbf16, #tpu.memory_space<vmem>>, vector<4x128xbf16>
      %cst_18 = arith.constant dense<0.000000e+00> : vector<128x128xf32>
      %26 = tpu.matmul %24, %25, %cst_18 {dimension_numbers = #tpu.dot_dimension_numbers<[1], [0], [0], [1], [0, 0, 1, 1], [], []>} : vector<128x4xbf16>, vector<4x128xbf16>, vector<128x128xf32> -> vector<128x128xf32>
      %27 = arith.addf %22, %26 : vector<128x128xf32>
      %c1_i32_19 = arith.constant 1 : i32
      %28 = arith.addi %7, %c1_i32_19 : i32
      %c0_20 = arith.constant 0 : index
      %29 = arith.index_cast %28 : i32 to index
      %c0_21 = arith.constant 0 : index
      %c0_22 = arith.constant 0 : index
      %30 = vector.load %arg1[%c0_20, %29, %c0_21, %c0_22] : memref<1x18x18x4xbf16, #tpu.memory_space<vmem>>, vector<1x8x18x4xbf16>
      %31 = vector.shape_cast %30 : vector<1x8x18x4xbf16> to vector<8x18x4xbf16>
      %32 = vector.extract_strided_slice %31 {offsets = [0, 0, 0], sizes = [8, 16, 4], strides = [1, 1, 1]} : vector<8x18x4xbf16> to vector<8x16x4xbf16>
      %33 = vector.shape_cast %32 : vector<8x16x4xbf16> to vector<128x4xbf16>
      %c12 = arith.constant 12 : index
      %c0_23 = arith.constant 0 : index
      %34 = vector.load %arg2[%c12, %c0_23] : memref<36x128xbf16, #tpu.memory_space<vmem>>, vector<4x128xbf16>
      %cst_24 = arith.constant dense<0.000000e+00> : vector<128x128xf32>
      %35 = tpu.matmul %33, %34, %cst_24 {dimension_numbers = #tpu.dot_dimension_numbers<[1], [0], [0], [1], [0, 0, 1, 1], [], []>} : vector<128x4xbf16>, vector<4x128xbf16>, vector<128x128xf32> -> vector<128x128xf32>
      %36 = arith.addf %27, %35 : vector<128x128xf32>
      %37 = vector.extract_strided_slice %31 {offsets = [0, 1, 0], sizes = [8, 16, 4], strides = [1, 1, 1]} : vector<8x18x4xbf16> to vector<8x16x4xbf16>
      %38 = vector.shape_cast %37 : vector<8x16x4xbf16> to vector<128x4xbf16>
      %c16 = arith.constant 16 : index
      %c0_25 = arith.constant 0 : index
      %39 = vector.load %arg2[%c16, %c0_25] : memref<36x128xbf16, #tpu.memory_space<vmem>>, vector<4x128xbf16>
      %cst_26 = arith.constant dense<0.000000e+00> : vector<128x128xf32>
      %40 = tpu.matmul %38, %39, %cst_26 {dimension_numbers = #tpu.dot_dimension_numbers<[1], [0], [0], [1], [0, 0, 1, 1], [], []>} : vector<128x4xbf16>, vector<4x128xbf16>, vector<128x128xf32> -> vector<128x128xf32>
      %41 = arith.addf %36, %40 : vector<128x128xf32>
      %42 = vector.extract_strided_slice %31 {offsets = [0, 2, 0], sizes = [8, 16, 4], strides = [1, 1, 1]} : vector<8x18x4xbf16> to vector<8x16x4xbf16>
      %43 = vector.shape_cast %42 : vector<8x16x4xbf16> to vector<128x4xbf16>
      %c20 = arith.constant 20 : index
      %c0_27 = arith.constant 0 : index
      %44 = vector.load %arg2[%c20, %c0_27] : memref<36x128xbf16, #tpu.memory_space<vmem>>, vector<4x128xbf16>
      %cst_28 = arith.constant dense<0.000000e+00> : vector<128x128xf32>
      %45 = tpu.matmul %43, %44, %cst_28 {dimension_numbers = #tpu.dot_dimension_numbers<[1], [0], [0], [1], [0, 0, 1, 1], [], []>} : vector<128x4xbf16>, vector<4x128xbf16>, vector<128x128xf32> -> vector<128x128xf32>
      %46 = arith.addf %41, %45 : vector<128x128xf32>
      %c2_i32_29 = arith.constant 2 : i32
      %47 = arith.addi %7, %c2_i32_29 : i32
      %c0_30 = arith.constant 0 : index
      %48 = arith.index_cast %47 : i32 to index
      %c0_31 = arith.constant 0 : index
      %c0_32 = arith.constant 0 : index
      %49 = vector.load %arg1[%c0_30, %48, %c0_31, %c0_32] : memref<1x18x18x4xbf16, #tpu.memory_space<vmem>>, vector<1x8x18x4xbf16>
      %50 = vector.shape_cast %49 : vector<1x8x18x4xbf16> to vector<8x18x4xbf16>
      %51 = vector.extract_strided_slice %50 {offsets = [0, 0, 0], sizes = [8, 16, 4], strides = [1, 1, 1]} : vector<8x18x4xbf16> to vector<8x16x4xbf16>
      %52 = vector.shape_cast %51 : vector<8x16x4xbf16> to vector<128x4xbf16>
      %c24 = arith.constant 24 : index
      %c0_33 = arith.constant 0 : index
      %53 = vector.load %arg2[%c24, %c0_33] : memref<36x128xbf16, #tpu.memory_space<vmem>>, vector<4x128xbf16>
      %cst_34 = arith.constant dense<0.000000e+00> : vector<128x128xf32>
      %54 = tpu.matmul %52, %53, %cst_34 {dimension_numbers = #tpu.dot_dimension_numbers<[1], [0], [0], [1], [0, 0, 1, 1], [], []>} : vector<128x4xbf16>, vector<4x128xbf16>, vector<128x128xf32> -> vector<128x128xf32>
      %55 = arith.addf %46, %54 : vector<128x128xf32>
      %56 = vector.extract_strided_slice %50 {offsets = [0, 1, 0], sizes = [8, 16, 4], strides = [1, 1, 1]} : vector<8x18x4xbf16> to vector<8x16x4xbf16>
      %57 = vector.shape_cast %56 : vector<8x16x4xbf16> to vector<128x4xbf16>
      %c28 = arith.constant 28 : index
      %c0_35 = arith.constant 0 : index
      %58 = vector.load %arg2[%c28, %c0_35] : memref<36x128xbf16, #tpu.memory_space<vmem>>, vector<4x128xbf16>
      %cst_36 = arith.constant dense<0.000000e+00> : vector<128x128xf32>
      %59 = tpu.matmul %57, %58, %cst_36 {dimension_numbers = #tpu.dot_dimension_numbers<[1], [0], [0], [1], [0, 0, 1, 1], [], []>} : vector<128x4xbf16>, vector<4x128xbf16>, vector<128x128xf32> -> vector<128x128xf32>
      %60 = arith.addf %55, %59 : vector<128x128xf32>
      %61 = vector.extract_strided_slice %50 {offsets = [0, 2, 0], sizes = [8, 16, 4], strides = [1, 1, 1]} : vector<8x18x4xbf16> to vector<8x16x4xbf16>
      %62 = vector.shape_cast %61 : vector<8x16x4xbf16> to vector<128x4xbf16>
      %c32 = arith.constant 32 : index
      %c0_37 = arith.constant 0 : index
      %63 = vector.load %arg2[%c32, %c0_37] : memref<36x128xbf16, #tpu.memory_space<vmem>>, vector<4x128xbf16>
      %cst_38 = arith.constant dense<0.000000e+00> : vector<128x128xf32>
      %64 = tpu.matmul %62, %63, %cst_38 {dimension_numbers = #tpu.dot_dimension_numbers<[1], [0], [0], [1], [0, 0, 1, 1], [], []>} : vector<128x4xbf16>, vector<4x128xbf16>, vector<128x128xf32> -> vector<128x128xf32>
      %65 = arith.addf %60, %64 : vector<128x128xf32>
      %66 = vector.broadcast %1 : vector<1x128xf32> to vector<128x128xf32>
      %67 = arith.mulf %65, %66 : vector<128x128xf32>
      %68 = vector.broadcast %3 : vector<1x128xf32> to vector<128x128xf32>
      %69 = arith.addf %67, %68 : vector<128x128xf32>
      %cst_39 = arith.constant 0.000000e+00 : f32
      %70 = vector.broadcast %cst_39 : f32 to vector<128x128xf32>
      %71 = arith.maximumf %69, %70 : vector<128x128xf32>
      %72 = tpu.transpose %71, [1, 0] : vector<128x128xf32> -> vector<128x128xf32>
      %c128_i32 = arith.constant 128 : i32
      %73 = arith.muli %6, %c128_i32 : i32
      %74 = tpu.assume_multiple %73, 128 : i32
      %75 = vector.extract_strided_slice %72 {offsets = [0, 0], sizes = [8, 128], strides = [1, 1]} : vector<128x128xf32> to vector<8x128xf32>
      %c0_40 = arith.constant 0 : index
      %c0_41 = arith.constant 0 : index
      %76 = arith.index_cast %74 : i32 to index
      %77 = vector.load %arg5[%c0_40, %c0_41, %76] : memref<1x8x256xf32, #tpu.memory_space<vmem>>, vector<1x8x128xf32>
      %78 = vector.shape_cast %77 : vector<1x8x128xf32> to vector<8x128xf32>
      %79 = vector.shape_cast %75 : vector<8x128xf32> to vector<1x8x128xf32>
      tpu.vector_store %arg5[%c0_40, %c0_41, %76], %79 {strides = array<i32>} : memref<1x8x256xf32, #tpu.memory_space<vmem>>, vector<1x8x128xf32>,
    }
    %c2_i32_5 = arith.constant 2 : i32
    return
  }
  func.func @transform_0(%arg0: i32) -> (i32, i32, i32, i32) {
    %c0_i32 = arith.constant 0 : i32
    %c0_i32_0 = arith.constant 0 : i32
    %c0_i32_1 = arith.constant 0 : i32
    %c0_i32_2 = arith.constant 0 : i32
    return %arg0, %c0_i32, %c0_i32_0, %c0_i32_1 : i32, i32, i32, i32
  }
  func.func @transform_1(%arg0: i32) -> (i32, i32) {
    %c0_i32 = arith.constant 0 : i32
    %c0_i32_0 = arith.constant 0 : i32
    %c0_i32_1 = arith.constant 0 : i32
    return %c0_i32, %c0_i32_0 : i32, i32
  }
  func.func @transform_2(%arg0: i32) -> (i32, i32, i32) {
    %c0_i32 = arith.constant 0 : i32
    %c0_i32_0 = arith.constant 0 : i32
    %c0_i32_1 = arith.constant 0 : i32
    return %arg0, %c0_i32, %c0_i32_0 : i32, i32, i32
  }
  func.func @transform_3(%arg0: i32) -> (i32, i32, i32) {
    %c0_i32 = arith.constant 0 : i32
    %c0_i32_0 = arith.constant 0 : i32
    %c0_i32_1 = arith.constant 0 : i32
    return %arg0, %c0_i32, %c0_i32_0 : i32, i32, i32
  }
  func.func @transform_4(%arg0: i32) -> (i32, i32, i32) {
    %c0_i32 = arith.constant 0 : i32
    %c0_i32_0 = arith.constant 0 : i32
    %c0_i32_1 = arith.constant 0 : i32
    return %arg0, %c0_i32, %c0_i32_0 : i32, i32, i32
  }
}

</mosaic_0001>

<llo_original>
// kernel: neg.1
$region0: #{neg.1}
  #allocation0 [shape = 's32[1]{0}', space=sflag, size = 0x4, scoped, tag = 'scoped memory for neg.1']
  %s0 = inlined_call_operand.vmem [shape: f32[2,8], index: 0, kind: input, shape index: {}]
  %s1 = inlined_call_operand.vmem [shape: f32[2,8], index: 1, kind: output, shape index: {}]
  %v2 = vld [vmem:[%s0] sm:$0xff]
  %3 = xla_tuple %v2
  %4 = xla_tuple %3
  %v5 = vxor.u32 %v2, 2147483648
  %6 = xla_tuple %v5
  %7 = vst [vmem:[%s1] sm:$0xff] %v5

// kernel: fbs_forward.2
$region0: #{fbs_forward.2}
  #allocation0 [shape = 'u32[]', space=smem, size = 0x4, offset = 0x4, fixed_abs, tag = 'smem constant byte address 0x4 - core index']
  #allocation1 [shape = 'u32[72,128]{1,0:T(1,128)}', space=vmem, size = 0x9000, scoped, tag = 'internal scratch']
  %s0 = inlined_call_operand.vmem [shape: bf16[2,18,18,4], index: 0, kind: input, shape index: {}]
  %s1 = inlined_call_operand.vmem [shape: f32[4,8], index: 1, kind: input, shape index: {}]
  %s2 = inlined_call_operand.vmem [shape: f32[1,8], index: 2, kind: input, shape index: {}]
  %s3 = inlined_call_operand.vmem [shape: f32[2,1,8], index: 3, kind: output, shape index: {}]
  %s4 = sld [smem:[#allocation0]]
  $region45: #{fbs_forward.2} parent=0
    _
  %s6 = ssub.s32 1, %s4
  %s7 = scalar_select 0, %s6, %s4
  loop: start=0, step=1, limit=4
  $region2: #{fbs_forward.2} parent=0 // loop_pre_header
    _
  $region3: #{fbs_forward.2} parent=0 // loop_header
    %s9 = sphi 0, %s13
    %p10 = scmp.ge.s32.totalorder %s9, 4
    %s19 = sphi 0, %s21
    %s22 = sphi 0, %s19
    %s23 = sphi 0, %s22
    %s39 = sphi 0, %s23
    %s43 = sphi 0, %s43
    %s45 = sphi 0, %s43
    %s46 = sphi 0, %s45
    %s60 = sphi 0, %s46
    %s64 = sphi 0, %s64
    %s66 = sphi 0, %s64
    %s67 = sphi 0, %s66
    %s81 = sphi 0, %s67
    %s87 = sphi 0, %s89
    %s90 = sphi 0, %s87
    %s91 = sphi 0, %s90
    %s107 = sphi 0, %s91
  $region4: #{fbs_forward.2} parent=0 // loop_header_branch
    %12 = sbr.rel (%p10) target = $region8
  $region5: #{fbs_forward.2} parent=0 // loop_body
    %s14 = ssub.s32 %s9, 1
    %s15 = ssub.s32 %s9, 2
    %s16 = sadd.s32 %s9, 1
    %s17 = ssub.s32 %s9, %s16
    %p18 = scmp.eq.s32.totalorder %s17, 0
    %s20 = sadd.s32 %s19, 1
    %s21 = scalar_select %p18, %s19, %s20
    %p24 = pneg %p18
    %p25 = scmp.eq.s32.totalorder %s9, 1
    %p26 = por %p24, %p25
    %p27 = scmp.ne.s32.totalorder %s19, %s22
    %p28 = scmp.eq.s32.totalorder %s9, 0
    %p29 = por %p27, %p28
    %p30 = scmp.ne.s32.totalorder %s19, %s22
    %p31 = scmp.eq.s32.totalorder %s14, 1
    %p32 = por %p30, %p31
    %p33 = scmp.ne.s32.totalorder %s22, %s23
    %p34 = scmp.eq.s32.totalorder %s14, 0
    %p35 = por %p33, %p34
    %p36 = scmp.ne.s32.totalorder %s22, %s23
    %p37 = scmp.eq.s32.totalorder %s15, 1
    %p38 = por %p36, %p37
    %p40 = scmp.ne.s32.totalorder %s23, %s39
    %p41 = scmp.eq.s32.totalorder %s15, 0
    %p42 = por %p40, %p41
    %s44 = sadd.s32 %s43, 1
    %p47 = scmp.eq.s32.totalorder %s9, 1
    %p48 = scmp.ne.s32.totalorder %s43, %s45
    %p49 = scmp.eq.s32.totalorder %s9, 0
    %p50 = por %p48, %p49
    %p51 = scmp.ne.s32.totalorder %s43, %s45
    %p52 = scmp.eq.s32.totalorder %s14, 1
    %p53 = por %p51, %p52
    %p54 = scmp.ne.s32.totalorder %s45, %s46
    %p55 = scmp.eq.s32.totalorder %s14, 0
    %p56 = por %p54, %p55
    %p57 = scmp.ne.s32.totalorder %s45, %s46
    %p58 = scmp.eq.s32.totalorder %s15, 1
    %p59 = por %p57, %p58
    %p61 = scmp.ne.s32.totalorder %s46, %s60
    %p62 = scmp.eq.s32.totalorder %s15, 0
    %p63 = por %p61, %p62
    %s65 = sadd.s32 %s64, 1
    %p68 = scmp.eq.s32.totalorder %s9, 1
    %p69 = scmp.ne.s32.totalorder %s64, %s66
    %p70 = scmp.eq.s32.totalorder %s9, 0
    %p71 = por %p69, %p70
    %p72 = scmp.ne.s32.totalorder %s64, %s66
    %p73 = scmp.eq.s32.totalorder %s14, 1
    %p74 = por %p72, %p73
    %p75 = scmp.ne.s32.totalorder %s66, %s67
    %p76 = scmp.eq.s32.totalorder %s14, 0
    %p77 = por %p75, %p76
    %p78 = scmp.ne.s32.totalorder %s66, %s67
    %p79 = scmp.eq.s32.totalorder %s15, 1
    %p80 = por %p78, %p79
    %p82 = scmp.ne.s32.totalorder %s67, %s81
    %p83 = scmp.eq.s32.totalorder %s15, 0
    %p84 = por %p82, %p83
    %s85 = ssub.s32 %s9, %s16
    %p86 = scmp.eq.s32.totalorder %s85, 0
    %s88 = sadd.s32 %s87, 1
    %s89 = scalar_select %p86, %s87, %s88
    %p92 = pneg %p86
    %p93 = scmp.eq.s32.totalorder %s9, 1
    %p94 = por %p92, %p93
    %p95 = scmp.ne.s32.totalorder %s87, %s90
    %p96 = scmp.eq.s32.totalorder %s9, 0
    %p97 = por %p95, %p96
    %p98 = scmp.ne.s32.totalorder %s87, %s90
    %p99 = scmp.eq.s32.totalorder %s14, 1
    %p100 = por %p98, %p99
    %p101 = scmp.ne.s32.totalorder %s90, %s91
    %p102 = scmp.eq.s32.totalorder %s14, 0
    %p103 = por %p101, %p102
    %p104 = scmp.ne.s32.totalorder %s90, %s91
    %p105 = scmp.eq.s32.totalorder %s15, 1
    %p106 = por %p104, %p105
    %p108 = scmp.ne.s32.totalorder %s91, %s107
    %p109 = scmp.eq.s32.totalorder %s15, 0
    %p110 = por %p108, %p109
    %p111 = scmp.le.s32.totalorder 1, %s9
    %p112 = scmp.lt.s32.totalorder %s9, 3
    %p113 = pnand %p111, %p112
    %p114 = pneg %p113
    // Predicated region
    $region9: #{fbs_forward.2} parent=5 // pred_check
      _
    $region10: #{fbs_forward.2} parent=5 // pred_check_branch
      %116 = sbr.rel (%p113) target = $region12
    $region11: #{fbs_forward.2} parent=5 // pred_region
      %s117 = ssub.s32 %s9, 1
      // Predicated region
      $region13: #{fbs_forward.2} parent=11 // pred_check
        %p118 = pneg %p56
      $region14: #{fbs_forward.2} parent=11 // pred_check_branch
        %120 = sbr.rel (%p118) target = $region16
      $region15: #{fbs_forward.2} parent=11 // pred_region
        _
      $region16: #{fbs_forward.2} parent=11 // pred_fallthru
        _
      // Predicated region
      $region17: #{fbs_forward.2} parent=11 // pred_check
        %p121 = pneg %p77
      $region18: #{fbs_forward.2} parent=11 // pred_check_branch
        %123 = sbr.rel (%p121) target = $region20
      $region19: #{fbs_forward.2} parent=11 // pred_region
        _
      $region20: #{fbs_forward.2} parent=11 // pred_fallthru
        _
    $region12: #{fbs_forward.2} parent=5 // pred_fallthru
      _
    %p124 = scmp.lt.s32.totalorder %s9, 2
    // Predicated region
    $region21: #{fbs_forward.2} parent=5 // pred_check
      %p125 = pneg %p124
    $region22: #{fbs_forward.2} parent=5 // pred_check_branch
      %127 = sbr.rel (%p125) target = $region24
    $region23: #{fbs_forward.2} parent=5 // pred_region
      // Predicated region
      $region25: #{fbs_forward.2} parent=23 // pred_check
        %p128 = pneg %p29
      $region26: #{fbs_forward.2} parent=23 // pred_check_branch
        %130 = sbr.rel (%p128) target = $region28
      $region27: #{fbs_forward.2} parent=23 // pred_region
        %p131 = scmp.lt.s32.totalorder %s9, 1
        %s132 = scalar_select %p131, %s9, 1
        %s133 = smul.addr %s132, 54
        %s134 = smul.addr %s133, 4
        %s135 = scalar_lea.vmem %s0, %s134
      $region28: #{fbs_forward.2} parent=23 // pred_fallthru
        _
    $region24: #{fbs_forward.2} parent=5 // pred_fallthru
      _
    %p136 = scmp.le.s32.totalorder 1, %s9
    %p137 = scmp.lt.s32.totalorder %s9, 3
    %p138 = pnand %p136, %p137
    %p139 = pneg %p138
    // Predicated region
    $region29: #{fbs_forward.2} parent=5 // pred_check
      _
    $region30: #{fbs_forward.2} parent=5 // pred_check_branch
      %141 = sbr.rel (%p138) target = $region32
    $region31: #{fbs_forward.2} parent=5 // pred_region
      %s142 = ssub.s32 %s9, 1
      %p143 = scmp.lt.s32.totalorder %s14, 1
      %s144 = scalar_select %p143, %s14, 1
      %s145 = smul.addr %s144, 54
      %s146 = smul.addr %s145, 4
      %s147 = scalar_lea.vmem %s0, %s146
      %p148 = pneg %p35
      %p149 = pneg %p32
      %p150 = pneg %p56
      %p151 = pneg %p53
      %p152 = pneg %p77
      %p153 = pneg %p74
      %p154 = pneg %p103
      %p155 = pneg %p100
      %p156 = scmp.lt.s32.totalorder %s14, 1
      %s157 = scalar_select %p156, %s14, 1
      %s158 = scalar_lea.vmem %s3, %s157
      %p159 = scmp.lt.s32.totalorder %s14, 1
      %s160 = scalar_select %p159, %s14, 1
      %s161 = smul.addr %s160, 54
      %s162 = smul.addr %s161, 4
      %s163 = scalar_lea.vmem %s0, %s162
      %p164 = scmp.lt.s32.totalorder %s14, 1
      %s165 = scalar_select %p164, %s14, 1
      %s166 = scalar_lea.vmem %s3, %s165
      %v167 = vld [vmem:[%s163] sm:$0xf]
      %v168 = vld [vmem:[%s163 + $0x4] sm:$0xf]
      %v169 = vld [vmem:[%s163 + $0x8] sm:$0x1]
      %v170 = vld [vmem:[%s163 + $0xc] sm:$0xf]
      %v171 = vld [vmem:[%s163 + $0x10] sm:$0xf]
      %v172 = vld [vmem:[%s163 + $0x14] sm:$0x1]
      %v173 = vld [vmem:[%s163 + $0x18] sm:$0xf]
      %v174 = vld [vmem:[%s163 + $0x1c] sm:$0xf]
      %v175 = vld [vmem:[%s163 + $0x20] sm:$0x1]
      %v176 = vld [vmem:[%s163 + $0x24] sm:$0xf]
      %v177 = vld [vmem:[%s163 + $0x28] sm:$0xf]
      %v178 = vld [vmem:[%s163 + $0x2c] sm:$0x1]
      %v179 = vld [vmem:[%s163 + $0x30] sm:$0xf]
      %v180 = vld [vmem:[%s163 + $0x34] sm:$0xf]
      %v181 = vld [vmem:[%s163 + $0x38] sm:$0x1]
      %v182 = vld [vmem:[%s163 + $0x3c] sm:$0xf]
      %v183 = vld [vmem:[%s163 + $0x40] sm:$0xf]
      %v184 = vld [vmem:[%s163 + $0x44] sm:$0x1]
      %v185 = vld [vmem:[%s163 + $0x48] sm:$0xf]
      %v186 = vld [vmem:[%s163 + $0x4c] sm:$0xf]
      %v187 = vld [vmem:[%s163 + $0x50] sm:$0x1]
      %v188 = vld [vmem:[%s163 + $0x54] sm:$0xf]
      %v189 = vld [vmem:[%s163 + $0x58] sm:$0xf]
      %v190 = vld [vmem:[%s163 + $0x5c] sm:$0x1]
      %v191 = vld [vmem:[%s163 + $0x60] sm:$0xf]
      %v192 = vld [vmem:[%s163 + $0x64] sm:$0xf]
      %v193 = vld [vmem:[%s163 + $0x68] sm:$0x1]
      %v194 = vld [vmem:[%s163 + $0x6c] sm:$0xf]
      %v195 = vld [vmem:[%s163 + $0x70] sm:$0xf]
      %v196 = vld [vmem:[%s163 + $0x74] sm:$0x1]
      %v197 = vld [vmem:[%s163 + $0x78] sm:$0xf]
      %v198 = vld [vmem:[%s163 + $0x7c] sm:$0xf]
      %v199 = vld [vmem:[%s163 + $0x80] sm:$0x1]
      %v200 = vld [vmem:[%s163 + $0x84] sm:$0xf]
      %v201 = vld [vmem:[%s163 + $0x88] sm:$0xf]
      %v202 = vld [vmem:[%s163 + $0x8c] sm:$0x1]
      %v203 = vld [vmem:[%s163 + $0x90] sm:$0xf]
      %v204 = vld [vmem:[%s163 + $0x94] sm:$0xf]
      %v205 = vld [vmem:[%s163 + $0x98] sm:$0x1]
      %v206 = vld [vmem:[%s163 + $0x9c] sm:$0xf]
      %v207 = vld [vmem:[%s163 + $0xa0] sm:$0xf]
      %v208 = vld [vmem:[%s163 + $0xa4] sm:$0x1]
      %v209 = vld [vmem:[%s163 + $0xa8] sm:$0xf]
      %v210 = vld [vmem:[%s163 + $0xac] sm:$0xf]
      %v211 = vld [vmem:[%s163 + $0xb0] sm:$0x1]
      %v212 = vld [vmem:[%s163 + $0xb4] sm:$0xf]
      %v213 = vld [vmem:[%s163 + $0xb8] sm:$0xf]
      %v214 = vld [vmem:[%s163 + $0xbc] sm:$0x1]
      %v215 = vld [vmem:[%s163 + $0xc0] sm:$0xf]
      %v216 = vld [vmem:[%s163 + $0xc4] sm:$0xf]
      %v217 = vld [vmem:[%s163 + $0xc8] sm:$0x1]
      %v218 = vld [vmem:[%s163 + $0xcc] sm:$0xf]
      %v219 = vld [vmem:[%s163 + $0xd0] sm:$0xf]
      %v220 = vld [vmem:[%s163 + $0xd4] sm:$0x1]
      %v221 = vunpack.c.l.bf16 %v167
      %v222 = vunpack.c.l.bf16 %v168
      %v223 = vunpack.c.l.bf16 %v169
      %v224 = vunpack.c.l.bf16 %v170
      %v225 = vunpack.c.l.bf16 %v171
      %v226 = vunpack.c.l.bf16 %v172
      %v227 = vunpack.c.l.bf16 %v173
      %v228 = vunpack.c.l.bf16 %v174
      %v229 = vunpack.c.l.bf16 %v175
      %v230 = vunpack.c.l.bf16 %v176
      %v231 = vunpack.c.l.bf16 %v177
      %v232 = vunpack.c.l.bf16 %v178
      %v233 = vunpack.c.l.bf16 %v179
      %v234 = vunpack.c.l.bf16 %v180
      %v235 = vunpack.c.l.bf16 %v181
      %v236 = vunpack.c.l.bf16 %v182
      %v237 = vunpack.c.l.bf16 %v183
      %v238 = vunpack.c.l.bf16 %v184
      %v239 = vunpack.c.l.bf16 %v185
      %v240 = vunpack.c.l.bf16 %v186
      %v241 = vunpack.c.l.bf16 %v187
      %v242 = vunpack.c.l.bf16 %v188
      %v243 = vunpack.c.l.bf16 %v189
      %v244 = vunpack.c.l.bf16 %v190
      %v245 = vunpack.c.l.bf16 %v191
      %v246 = vunpack.c.l.bf16 %v192
      %v247 = vunpack.c.l.bf16 %v193
      %v248 = vunpack.c.l.bf16 %v194
      %v249 = vunpack.c.l.bf16 %v195
      %v250 = vunpack.c.l.bf16 %v196
      %v251 = vunpack.c.l.bf16 %v197
      %v252 = vunpack.c.l.bf16 %v198
      %v253 = vunpack.c.l.bf16 %v199
      %v254 = vunpack.c.l.bf16 %v200
      %v255 = vunpack.c.l.bf16 %v201
      %v256 = vunpack.c.l.bf16 %v202
      %v257 = vunpack.c.l.bf16 %v203
      %v258 = vunpack.c.l.bf16 %v204
      %v259 = vunpack.c.l.bf16 %v205
      %v260 = vunpack.c.l.bf16 %v206
      %v261 = vunpack.c.l.bf16 %v207
      %v262 = vunpack.c.l.bf16 %v208
      %v263 = vunpack.c.l.bf16 %v209
      %v264 = vunpack.c.l.bf16 %v210
      %v265 = vunpack.c.l.bf16 %v211
      %v266 = vunpack.c.l.bf16 %v212
      %v267 = vunpack.c.l.bf16 %v213
      %v268 = vunpack.c.l.bf16 %v214
      %v269 = vunpack.c.l.bf16 %v215
      %v270 = vunpack.c.l.bf16 %v216
      %v271 = vunpack.c.l.bf16 %v217
      %v272 = vunpack.c.l.bf16 %v218
      %v273 = vunpack.c.l.bf16 %v219
      %v274 = vunpack.c.l.bf16 %v220
      %v275 = vand.u32 2147483647, %v221
      %v276 = vand.u32 2147483647, %v222
      %v277 = vand.u32 2147483647, %v223
      %v278 = vand.u32 2147483647, %v224
      %v279 = vand.u32 2147483647, %v225
      %v280 = vand.u32 2147483647, %v226
      %v281 = vand.u32 2147483647, %v227
      %v282 = vand.u32 2147483647, %v228
      %v283 = vand.u32 2147483647, %v229
      %v284 = vand.u32 2147483647, %v230
      %v285 = vand.u32 2147483647, %v231
      %v286 = vand.u32 2147483647, %v232
      %v287 = vand.u32 2147483647, %v233
      %v288 = vand.u32 2147483647, %v234
      %v289 = vand.u32 2147483647, %v235
      %v290 = vand.u32 2147483647, %v236
      %v291 = vand.u32 2147483647, %v237
      %v292 = vand.u32 2147483647, %v238
      %v293 = vand.u32 2147483647, %v239
      %v294 = vand.u32 2147483647, %v240
      %v295 = vand.u32 2147483647, %v241
      %v296 = vand.u32 2147483647, %v242
      %v297 = vand.u32 2147483647, %v243
      %v298 = vand.u32 2147483647, %v244
      %v299 = vand.u32 2147483647, %v245
      %v300 = vand.u32 2147483647, %v246
      %v301 = vand.u32 2147483647, %v247
      %v302 = vand.u32 2147483647, %v248
      %v303 = vand.u32 2147483647, %v249
      %v304 = vand.u32 2147483647, %v250
      %v305 = vand.u32 2147483647, %v251
      %v306 = vand.u32 2147483647, %v252
      %v307 = vand.u32 2147483647, %v253
      %v308 = vand.u32 2147483647, %v254
      %v309 = vand.u32 2147483647, %v255
      %v310 = vand.u32 2147483647, %v256
      %v311 = vand.u32 2147483647, %v257
      %v312 = vand.u32 2147483647, %v258
      %v313 = vand.u32 2147483647, %v259
      %v314 = vand.u32 2147483647, %v260
      %v315 = vand.u32 2147483647, %v261
      %v316 = vand.u32 2147483647, %v262
      %v317 = vand.u32 2147483647, %v263
      %v318 = vand.u32 2147483647, %v264
      %v319 = vand.u32 2147483647, %v265
      %v320 = vand.u32 2147483647, %v266
      %v321 = vand.u32 2147483647, %v267
      %v322 = vand.u32 2147483647, %v268
      %v323 = vand.u32 2147483647, %v269
      %v324 = vand.u32 2147483647, %v270
      %v325 = vand.u32 2147483647, %v271
      %v326 = vand.u32 2147483647, %v272
      %v327 = vand.u32 2147483647, %v273
      %v328 = vand.u32 2147483647, %v274
      %vm329 = vcmask 31744
      %v330 = vsel %vm329, %v275, 0.0
      %v331 = vsel %vm329, %v276, 0.0
      %v332 = vadd.f32 %v330, %v331
      %vm333 = vcmask 25600
      %v334 = vsel %vm333, %v277, 0.0
      %v335 = vadd.f32 %v332, %v334
      %v336 = vsel %vm329, %v278, 0.0
      %v337 = vadd.f32 %v335, %v336
      %v338 = vsel %vm329, %v279, 0.0
      %v339 = vadd.f32 %v337, %v338
      %v340 = vsel %vm333, %v280, 0.0
      %v341 = vadd.f32 %v339, %v340
      %v342 = vsel %vm329, %v281, 0.0
      %v343 = vadd.f32 %v341, %v342
      %v344 = vsel %vm329, %v282, 0.0
      %v345 = vadd.f32 %v343, %v344
      %v346 = vsel %vm333, %v283, 0.0
      %v347 = vadd.f32 %v345, %v346
      %v348 = vsel %vm329, %v284, 0.0
      %v349 = vadd.f32 %v347, %v348
      %v350 = vsel %vm329, %v285, 0.0
      %v351 = vadd.f32 %v349, %v350
      %v352 = vsel %vm333, %v286, 0.0
      %v353 = vadd.f32 %v351, %v352
      %v354 = vsel %vm329, %v287, 0.0
      %v355 = vadd.f32 %v353, %v354
      %v356 = vsel %vm329, %v288, 0.0
      %v357 = vadd.f32 %v355, %v356
      %v358 = vsel %vm333, %v289, 0.0
      %v359 = vadd.f32 %v357, %v358
      %v360 = vsel %vm329, %v290, 0.0
      %v361 = vadd.f32 %v359, %v360
      %v362 = vsel %vm329, %v291, 0.0
      %v363 = vadd.f32 %v361, %v362
      %v364 = vsel %vm333, %v292, 0.0
      %v365 = vadd.f32 %v363, %v364
      %v366 = vsel %vm329, %v293, 0.0
      %v367 = vadd.f32 %v365, %v366
      %v368 = vsel %vm329, %v294, 0.0
      %v369 = vadd.f32 %v367, %v368
      %v370 = vsel %vm333, %v295, 0.0
      %v371 = vadd.f32 %v369, %v370
      %v372 = vsel %vm329, %v296, 0.0
      %v373 = vadd.f32 %v371, %v372
      %v374 = vsel %vm329, %v297, 0.0
      %v375 = vadd.f32 %v373, %v374
      %v376 = vsel %vm333, %v298, 0.0
      %v377 = vadd.f32 %v375, %v376
      %v378 = vsel %vm329, %v299, 0.0
      %v379 = vadd.f32 %v377, %v378
      %v380 = vsel %vm329, %v300, 0.0
      %v381 = vadd.f32 %v379, %v380
      %v382 = vsel %vm333, %v301, 0.0
      %v383 = vadd.f32 %v381, %v382
      %v384 = vsel %vm329, %v302, 0.0
      %v385 = vadd.f32 %v383, %v384
      %v386 = vsel %vm329, %v303, 0.0
      %v387 = vadd.f32 %v385, %v386
      %v388 = vsel %vm333, %v304, 0.0
      %v389 = vadd.f32 %v387, %v388
      %v390 = vsel %vm329, %v305, 0.0
      %v391 = vadd.f32 %v389, %v390
      %v392 = vsel %vm329, %v306, 0.0
      %v393 = vadd.f32 %v391, %v392
      %v394 = vsel %vm333, %v307, 0.0
      %v395 = vadd.f32 %v393, %v394
      %v396 = vsel %vm329, %v308, 0.0
      %v397 = vadd.f32 %v395, %v396
      %v398 = vsel %vm329, %v309, 0.0
      %v399 = vadd.f32 %v397, %v398
      %v400 = vsel %vm333, %v310, 0.0
      %v401 = vadd.f32 %v399, %v400
      %v402 = vsel %vm329, %v311, 0.0
      %v403 = vadd.f32 %v401, %v402
      %v404 = vsel %vm329, %v312, 0.0
      %v405 = vadd.f32 %v403, %v404
      %v406 = vsel %vm333, %v313, 0.0
      %v407 = vadd.f32 %v405, %v406
      %v408 = vsel %vm329, %v314, 0.0
      %v409 = vadd.f32 %v407, %v408
      %v410 = vsel %vm329, %v315, 0.0
      %v411 = vadd.f32 %v409, %v410
      %v412 = vsel %vm333, %v316, 0.0
      %v413 = vadd.f32 %v411, %v412
      %v414 = vsel %vm329, %v317, 0.0
      %v415 = vadd.f32 %v413, %v414
      %v416 = vsel %vm329, %v318, 0.0
      %v417 = vadd.f32 %v415, %v416
      %v418 = vsel %vm333, %v319, 0.0
      %v419 = vadd.f32 %v417, %v418
      %v420 = vsel %vm329, %v320, 0.0
      %v421 = vadd.f32 %v419, %v420
      %v422 = vsel %vm329, %v321, 0.0
      %v423 = vadd.f32 %v421, %v422
      %v424 = vsel %vm333, %v322, 0.0
      %v425 = vadd.f32 %v423, %v424
      %v426 = vsel %vm329, %v323, 0.0
      %v427 = vadd.f32 %v425, %v426
      %v428 = vsel %vm329, %v324, 0.0
      %v429 = vadd.f32 %v427, %v428
      %v430 = vsel %vm333, %v325, 0.0
      %v431 = vadd.f32 %v429, %v430
      %v432 = vsel %vm329, %v326, 0.0
      %v433 = vadd.f32 %v431, %v432
      %v434 = vsel %vm329, %v327, 0.0
      %v435 = vadd.f32 %v433, %v434
      %v436 = vsel %vm333, %v328, 0.0
      %v437 = vadd.f32 %v435, %v436
      %v438 = vrot.slane %v437, 4
      %v439 = vadd.f32 %v437, %v438
      %v440 = vrot.slane %v439, 2
      %v441 = vadd.f32 %v439, %v440
      %v442 = vrot.slane %v441, 1
      %v443 = vadd.f32 %v441, %v442
      %v444 = vmul.f32 %v443, 0.00390625
      %v445 = vld [vmem:[%s1] sm:$0xf]
      %v446 = vld [vmem:[%s2] sm:$0x1]
      %v448 = vsel %vm329, %v444, 0
      %vm450 = vcmask 1043456
      %v452 = vsel %vm450, %v445, 0
      %454 = vmatpush.msra.mxu0 0.0
      %455 = vmatpush.msra.mxu0 0.0
      %456 = vmatpush.msra.mxu0 0.0
      %457 = vmatpush.msra.mxu0 0.0
      %458 = vmatpush.msra.mxu0 0.0
      %459 = vmatpush.msra.mxu0 0.0
      %460 = vmatpush.msra.mxu0 0.0
      %461 = vmatpush.msra.mxu0 0.0
      %462 = vmatpush.msra.mxu0 0.0
      %463 = vmatpush.msra.mxu0 0.0
      %464 = vmatpush.msra.mxu0 0.0
      %465 = vmatpush.msra.mxu0 0.0
      %466 = vmatpush.msra.mxu0 0.0
      %467 = vmatpush.msra.mxu0 0.0
      %468 = vmatpush.msra.mxu0 0.0
      %469 = vmatpush.msra.mxu0 %v452
      %470 = vmatmul.f32.gmra.mxu0 %v448
      %v471 = vpop.f32.mrf.mxu0
      %v472 = vadd.f32 %v446, %v471
      %473 = vdwg.mxu0
      %v474 = vmax.f32 %v472, 0.0
      %vm475 = vcmask 57344
      %476 = vst.msk [vmem:[%s166] sm:$0x1] %vm475, %v474
      %p477 = scmp.lt.s32.totalorder %s14, 1
      %s478 = scalar_select %p477, %s14, 1
      %s479 = scalar_lea.vmem %s3, %s478
      // Predicated region
      $region33: #{fbs_forward.2} parent=31 // pred_check
        %p480 = pneg %p100
      $region34: #{fbs_forward.2} parent=31 // pred_check_branch
        %482 = sbr.rel (%p480) target = $region36
      $region35: #{fbs_forward.2} parent=31 // pred_region
        _
      $region36: #{fbs_forward.2} parent=31 // pred_fallthru
        _
    $region32: #{fbs_forward.2} parent=5 // pred_fallthru
      _
    %p483 = scmp.le.s32.totalorder 2, %s9
    // Predicated region
    $region37: #{fbs_forward.2} parent=5 // pred_check
      %p484 = pneg %p483
    $region38: #{fbs_forward.2} parent=5 // pred_check_branch
      %486 = sbr.rel (%p484) target = $region40
    $region39: #{fbs_forward.2} parent=5 // pred_region
      %s487 = ssub.s32 %s9, 2
      // Predicated region
      $region41: #{fbs_forward.2} parent=39 // pred_check
        %p488 = pneg %p106
      $region42: #{fbs_forward.2} parent=39 // pred_check_branch
        %490 = sbr.rel (%p488) target = $region44
      $region43: #{fbs_forward.2} parent=39 // pred_region
        %p491 = scmp.lt.s32.totalorder %s15, 1
        %s492 = scalar_select %p491, %s15, 1
        %s493 = scalar_lea.vmem %s3, %s492
      $region44: #{fbs_forward.2} parent=39 // pred_fallthru
        _
    $region40: #{fbs_forward.2} parent=5 // pred_fallthru
      _
  $region6: #{fbs_forward.2} parent=0 // loop_footer
    %s13 = sadd.s32 1, %s9
  $region7: #{fbs_forward.2} parent=0 // loop_footer_branch
    %8 = sbr.rel target = $region3
  $region8: #{fbs_forward.2} parent=0 // loop_exit
    _

// kernel: fbs_forward.3
$region0: #{fbs_forward.3}
  #allocation0 [shape = 'u32[]', space=smem, size = 0x4, offset = 0x4, fixed_abs, tag = 'smem constant byte address 0x4 - core index']
  #allocation1 [shape = 'u32[72,128]{1,0:T(1,128)}', space=vmem, size = 0x9000, scoped, tag = 'internal scratch']
  %s0 = inlined_call_operand.vmem [shape: bf16[2,18,18,4], index: 0, kind: input, shape index: {}]
  %s1 = inlined_call_operand.vmem [shape: bf16[36,128], index: 1, kind: input, shape index: {}]
  %s2 = inlined_call_operand.vmem [shape: f32[2,1,128], index: 2, kind: input, shape index: {}]
  %s3 = inlined_call_operand.vmem [shape: f32[2,1,128], index: 3, kind: input, shape index: {}]
  %s4 = inlined_call_operand.vmem [shape: f32[2,8,256], index: 4, kind: output, shape index: {}]
  %s5 = sld [smem:[#allocation0]]
  $region56: #{fbs_forward.3} parent=0
    _
  %s7 = ssub.s32 1, %s5
  %s8 = scalar_select 0, %s7, %s5
  loop: start=0, step=1, limit=4
  $region2: #{fbs_forward.3} parent=0 // loop_pre_header
    _
  $region3: #{fbs_forward.3} parent=0 // loop_header
    %s10 = sphi 0, %s14
    %p11 = scmp.ge.s32.totalorder %s10, 4
    %s20 = sphi 0, %s22
    %s23 = sphi 0, %s20
    %s24 = sphi 0, %s23
    %s40 = sphi 0, %s24
    %s44 = sphi 0, %s44
    %s46 = sphi 0, %s44
    %s47 = sphi 0, %s46
    %s61 = sphi 0, %s47
    %s67 = sphi 0, %s69
    %s70 = sphi 0, %s67
    %s71 = sphi 0, %s70
    %s87 = sphi 0, %s71
    %s93 = sphi 0, %s95
    %s96 = sphi 0, %s93
    %s97 = sphi 0, %s96
    %s113 = sphi 0, %s97
    %s119 = sphi 0, %s121
    %s122 = sphi 0, %s119
    %s123 = sphi 0, %s122
    %s139 = sphi 0, %s123
  $region4: #{fbs_forward.3} parent=0 // loop_header_branch
    %13 = sbr.rel (%p11) target = $region8
  $region5: #{fbs_forward.3} parent=0 // loop_body
    %s15 = ssub.s32 %s10, 1
    %s16 = ssub.s32 %s10, 2
    %s17 = sadd.s32 %s10, 1
    %s18 = ssub.s32 %s10, %s17
    %p19 = scmp.eq.s32.totalorder %s18, 0
    %s21 = sadd.s32 %s20, 1
    %s22 = scalar_select %p19, %s20, %s21
    %p25 = pneg %p19
    %p26 = scmp.eq.s32.totalorder %s10, 1
    %p27 = por %p25, %p26
    %p28 = scmp.ne.s32.totalorder %s20, %s23
    %p29 = scmp.eq.s32.totalorder %s10, 0
    %p30 = por %p28, %p29
    %p31 = scmp.ne.s32.totalorder %s20, %s23
    %p32 = scmp.eq.s32.totalorder %s15, 1
    %p33 = por %p31, %p32
    %p34 = scmp.ne.s32.totalorder %s23, %s24
    %p35 = scmp.eq.s32.totalorder %s15, 0
    %p36 = por %p34, %p35
    %p37 = scmp.ne.s32.totalorder %s23, %s24
    %p38 = scmp.eq.s32.totalorder %s16, 1
    %p39 = por %p37, %p38
    %p41 = scmp.ne.s32.totalorder %s24, %s40
    %p42 = scmp.eq.s32.totalorder %s16, 0
    %p43 = por %p41, %p42
    %s45 = sadd.s32 %s44, 1
    %p48 = scmp.eq.s32.totalorder %s10, 1
    %p49 = scmp.ne.s32.totalorder %s44, %s46
    %p50 = scmp.eq.s32.totalorder %s10, 0
    %p51 = por %p49, %p50
    %p52 = scmp.ne.s32.totalorder %s44, %s46
    %p53 = scmp.eq.s32.totalorder %s15, 1
    %p54 = por %p52, %p53
    %p55 = scmp.ne.s32.totalorder %s46, %s47
    %p56 = scmp.eq.s32.totalorder %s15, 0
    %p57 = por %p55, %p56
    %p58 = scmp.ne.s32.totalorder %s46, %s47
    %p59 = scmp.eq.s32.totalorder %s16, 1
    %p60 = por %p58, %p59
    %p62 = scmp.ne.s32.totalorder %s47, %s61
    %p63 = scmp.eq.s32.totalorder %s16, 0
    %p64 = por %p62, %p63
    %s65 = ssub.s32 %s10, %s17
    %p66 = scmp.eq.s32.totalorder %s65, 0
    %s68 = sadd.s32 %s67, 1
    %s69 = scalar_select %p66, %s67, %s68
    %p72 = pneg %p66
    %p73 = scmp.eq.s32.totalorder %s10, 1
    %p74 = por %p72, %p73
    %p75 = scmp.ne.s32.totalorder %s67, %s70
    %p76 = scmp.eq.s32.totalorder %s10, 0
    %p77 = por %p75, %p76
    %p78 = scmp.ne.s32.totalorder %s67, %s70
    %p79 = scmp.eq.s32.totalorder %s15, 1
    %p80 = por %p78, %p79
    %p81 = scmp.ne.s32.totalorder %s70, %s71
    %p82 = scmp.eq.s32.totalorder %s15, 0
    %p83 = por %p81, %p82
    %p84 = scmp.ne.s32.totalorder %s70, %s71
    %p85 = scmp.eq.s32.totalorder %s16, 1
    %p86 = por %p84, %p85
    %p88 = scmp.ne.s32.totalorder %s71, %s87
    %p89 = scmp.eq.s32.totalorder %s16, 0
    %p90 = por %p88, %p89
    %s91 = ssub.s32 %s10, %s17
    %p92 = scmp.eq.s32.totalorder %s91, 0
    %s94 = sadd.s32 %s93, 1
    %s95 = scalar_select %p92, %s93, %s94
    %p98 = pneg %p92
    %p99 = scmp.eq.s32.totalorder %s10, 1
    %p100 = por %p98, %p99
    %p101 = scmp.ne.s32.totalorder %s93, %s96
    %p102 = scmp.eq.s32.totalorder %s10, 0
    %p103 = por %p101, %p102
    %p104 = scmp.ne.s32.totalorder %s93, %s96
    %p105 = scmp.eq.s32.totalorder %s15, 1
    %p106 = por %p104, %p105
    %p107 = scmp.ne.s32.totalorder %s96, %s97
    %p108 = scmp.eq.s32.totalorder %s15, 0
    %p109 = por %p107, %p108
    %p110 = scmp.ne.s32.totalorder %s96, %s97
    %p111 = scmp.eq.s32.totalorder %s16, 1
    %p112 = por %p110, %p111
    %p114 = scmp.ne.s32.totalorder %s97, %s113
    %p115 = scmp.eq.s32.totalorder %s16, 0
    %p116 = por %p114, %p115
    %s117 = ssub.s32 %s10, %s17
    %p118 = scmp.eq.s32.totalorder %s117, 0
    %s120 = sadd.s32 %s119, 1
    %s121 = scalar_select %p118, %s119, %s120
    %p124 = pneg %p118
    %p125 = scmp.eq.s32.totalorder %s10, 1
    %p126 = por %p124, %p125
    %p127 = scmp.ne.s32.totalorder %s119, %s122
    %p128 = scmp.eq.s32.totalorder %s10, 0
    %p129 = por %p127, %p128
    %p130 = scmp.ne.s32.totalorder %s119, %s122
    %p131 = scmp.eq.s32.totalorder %s15, 1
    %p132 = por %p130, %p131
    %p133 = scmp.ne.s32.totalorder %s122, %s123
    %p134 = scmp.eq.s32.totalorder %s15, 0
    %p135 = por %p133, %p134
    %p136 = scmp.ne.s32.totalorder %s122, %s123
    %p137 = scmp.eq.s32.totalorder %s16, 1
    %p138 = por %p136, %p137
    %p140 = scmp.ne.s32.totalorder %s123, %s139
    %p141 = scmp.eq.s32.totalorder %s16, 0
    %p142 = por %p140, %p141
    %p143 = scmp.le.s32.totalorder 1, %s10
    %p144 = scmp.lt.s32.totalorder %s10, 3
    %p145 = pnand %p143, %p144
    %p146 = pneg %p145
    // Predicated region
    $region9: #{fbs_forward.3} parent=5 // pred_check
      _
    $region10: #{fbs_forward.3} parent=5 // pred_check_branch
      %148 = sbr.rel (%p145) target = $region12
    $region11: #{fbs_forward.3} parent=5 // pred_region
      %s149 = ssub.s32 %s10, 1
      // Predicated region
      $region13: #{fbs_forward.3} parent=11 // pred_check
        %p150 = pneg %p57
      $region14: #{fbs_forward.3} parent=11 // pred_check_branch
        %152 = sbr.rel (%p150) target = $region16
      $region15: #{fbs_forward.3} parent=11 // pred_region
        _
      $region16: #{fbs_forward.3} parent=11 // pred_fallthru
        _
    $region12: #{fbs_forward.3} parent=5 // pred_fallthru
      _
    %p153 = scmp.lt.s32.totalorder %s10, 2
    // Predicated region
    $region17: #{fbs_forward.3} parent=5 // pred_check
      %p154 = pneg %p153
    $region18: #{fbs_forward.3} parent=5 // pred_check_branch
      %156 = sbr.rel (%p154) target = $region20
    $region19: #{fbs_forward.3} parent=5 // pred_region
      // Predicated region
      $region21: #{fbs_forward.3} parent=19 // pred_check
        %p157 = pneg %p30
      $region22: #{fbs_forward.3} parent=19 // pred_check_branch
        %159 = sbr.rel (%p157) target = $region24
      $region23: #{fbs_forward.3} parent=19 // pred_region
        %p160 = scmp.lt.s32.totalorder %s10, 1
        %s161 = scalar_select %p160, %s10, 1
        %s162 = smul.addr %s161, 54
        %s163 = smul.addr %s162, 4
        %s164 = scalar_lea.vmem %s0, %s163
      $region24: #{fbs_forward.3} parent=19 // pred_fallthru
        _
      // Predicated region
      $region25: #{fbs_forward.3} parent=19 // pred_check
        %p165 = pneg %p77
      $region26: #{fbs_forward.3} parent=19 // pred_check_branch
        %167 = sbr.rel (%p165) target = $region28
      $region27: #{fbs_forward.3} parent=19 // pred_region
        %p168 = scmp.lt.s32.totalorder %s10, 1
        %s169 = scalar_select %p168, %s10, 1
        %s170 = scalar_lea.vmem %s2, %s169
      $region28: #{fbs_forward.3} parent=19 // pred_fallthru
        _
      // Predicated region
      $region29: #{fbs_forward.3} parent=19 // pred_check
        %p171 = pneg %p103
      $region30: #{fbs_forward.3} parent=19 // pred_check_branch
        %173 = sbr.rel (%p171) target = $region32
      $region31: #{fbs_forward.3} parent=19 // pred_region
        %p174 = scmp.lt.s32.totalorder %s10, 1
        %s175 = scalar_select %p174, %s10, 1
        %s176 = scalar_lea.vmem %s3, %s175
      $region32: #{fbs_forward.3} parent=19 // pred_fallthru
        _
    $region20: #{fbs_forward.3} parent=5 // pred_fallthru
      _
    %p177 = scmp.le.s32.totalorder 1, %s10
    %p178 = scmp.lt.s32.totalorder %s10, 3
    %p179 = pnand %p177, %p178
    %p180 = pneg %p179
    // Predicated region
    $region33: #{fbs_forward.3} parent=5 // pred_check
      _
    $region34: #{fbs_forward.3} parent=5 // pred_check_branch
      %182 = sbr.rel (%p179) target = $region36
    $region35: #{fbs_forward.3} parent=5 // pred_region
      %s183 = ssub.s32 %s10, 1
      %p184 = scmp.lt.s32.totalorder %s15, 1
      %s185 = scalar_select %p184, %s15, 1
      %s186 = smul.addr %s185, 54
      %s187 = smul.addr %s186, 4
      %s188 = scalar_lea.vmem %s0, %s187
      %p189 = pneg %p36
      %p190 = pneg %p33
      %p191 = pneg %p57
      %p192 = pneg %p54
      %p193 = scmp.lt.s32.totalorder %s15, 1
      %s194 = scalar_select %p193, %s15, 1
      %s195 = scalar_lea.vmem %s2, %s194
      %p196 = pneg %p83
      %p197 = pneg %p80
      %p198 = scmp.lt.s32.totalorder %s15, 1
      %s199 = scalar_select %p198, %s15, 1
      %s200 = scalar_lea.vmem %s3, %s199
      %p201 = pneg %p109
      %p202 = pneg %p106
      %p203 = pneg %p135
      %p204 = pneg %p132
      %p205 = scmp.lt.s32.totalorder %s15, 1
      %s206 = scalar_select %p205, %s15, 1
      %s207 = smul.addr %s206, 2
      %s208 = smul.addr %s207, 8
      %s209 = scalar_lea.vmem %s4, %s208
      %p210 = scmp.lt.s32.totalorder %s15, 1
      %s211 = scalar_select %p210, %s15, 1
      %s212 = smul.addr %s211, 54
      %s213 = smul.addr %s212, 4
      %s214 = scalar_lea.vmem %s0, %s213
      %p215 = scmp.lt.s32.totalorder %s15, 1
      %s216 = scalar_select %p215, %s15, 1
      %s217 = scalar_lea.vmem %s2, %s216
      %p218 = scmp.lt.s32.totalorder %s15, 1
      %s219 = scalar_select %p218, %s15, 1
      %s220 = scalar_lea.vmem %s3, %s219
      %p221 = scmp.lt.s32.totalorder %s15, 1
      %s222 = scalar_select %p221, %s15, 1
      %s223 = smul.addr %s222, 2
      %s224 = smul.addr %s223, 8
      %s225 = scalar_lea.vmem %s4, %s224
      %v227 = vld [vmem:[%s217] sm:$0x1]
      %v228 = vld [vmem:[%s220] sm:$0x1]
      loop: start=0, step=1, limit=2
      $region37: #{fbs_forward.3} parent=35 // loop_pre_header
        _
      $region38: #{fbs_forward.3} parent=35 // loop_header
        %s230 = sphi 0, %s234
        %p231 = scmp.ge.s32.totalorder %s230, 2
      $region39: #{fbs_forward.3} parent=35 // loop_header_branch
        %233 = sbr.rel (%p231) target = $region43
      $region40: #{fbs_forward.3} parent=35 // loop_body
        %s235 = smul.u32 %s230, 8
        %s236 = smul.u32 %s235, 3
        %s237 = smul.addr %s236, 4
        %s238 = scalar_lea.vmem %s214, %s237
        %v239 = vld [vmem:[%s238] sm:$0xf]
        %v240 = vld [vmem:[%s238 + $0x4] sm:$0xf]
        %v241 = vld [vmem:[%s238 + $0x8] sm:$0x1]
        %v242 = vld [vmem:[%s238 + $0xc] sm:$0xf]
        %v243 = vld [vmem:[%s238 + $0x10] sm:$0xf]
        %v244 = vld [vmem:[%s238 + $0x14] sm:$0x1]
        %v245 = vld [vmem:[%s238 + $0x18] sm:$0xf]
        %v246 = vld [vmem:[%s238 + $0x1c] sm:$0xf]
        %v247 = vld [vmem:[%s238 + $0x20] sm:$0x1]
        %v248 = vld [vmem:[%s238 + $0x24] sm:$0xf]
        %v249 = vld [vmem:[%s238 + $0x28] sm:$0xf]
        %v250 = vld [vmem:[%s238 + $0x2c] sm:$0x1]
        %v251 = vld [vmem:[%s238 + $0x30] sm:$0xf]
        %v252 = vld [vmem:[%s238 + $0x34] sm:$0xf]
        %v253 = vld [vmem:[%s238 + $0x38] sm:$0x1]
        %v254 = vld [vmem:[%s238 + $0x3c] sm:$0xf]
        %v255 = vld [vmem:[%s238 + $0x40] sm:$0xf]
        %v256 = vld [vmem:[%s238 + $0x44] sm:$0x1]
        %v257 = vld [vmem:[%s238 + $0x48] sm:$0xf]
        %v258 = vld [vmem:[%s238 + $0x4c] sm:$0xf]
        %v259 = vld [vmem:[%s238 + $0x50] sm:$0x1]
        %v260 = vld [vmem:[%s238 + $0x54] sm:$0xf]
        %v261 = vld [vmem:[%s238 + $0x58] sm:$0xf]
        %v262 = vld [vmem:[%s238 + $0x5c] sm:$0x1]
        %v263 = vld [vmem:[%s1] sm:$0x3]
        %vm264 = vsmask.f32 3328
        %vm265 = vsmask.f32 7440
        %vm266 = vmor %vm264, %vm265
        %v268 = vshrl.u32 %v239, 16
        %v270 = vrot.slane %v268, 4
        %v271 = vshll.u32 %v239, 16
        %v273 = vrot.slane %v271, 5
        %v274 = vor.u32 %v270, %v273
        %v275 = vrot.slane %v274, 4
        %v277 = vshll.u32 %v240, 16
        %v279 = vrot.slane %v277, 5
        %v280 = vsel %vm266, %v275, %v279
        %v281 = vshrl.u32 %v240, 16
        %v283 = vrot.slane %v281, 4
        %v284 = vor.u32 %v283, %v279
        %v285 = vrot.slane %v284, 4
        %v287 = vshll.u32 %v241, 16
        %v289 = vrot.slane %v287, 5
        %v290 = vsel %vm266, %v285, %v289
        %v292 = vshrl.u32 %v242, 16
        %v294 = vrot.slane %v292, 4
        %v295 = vshll.u32 %v242, 16
        %v297 = vrot.slane %v295, 5
        %v298 = vor.u32 %v294, %v297
        %v299 = vrot.slane %v298, 4
        %v301 = vshll.u32 %v243, 16
        %v303 = vrot.slane %v301, 5
        %v304 = vsel %vm266, %v299, %v303
        %v305 = vshrl.u32 %v243, 16
        %v307 = vrot.slane %v305, 4
        %v308 = vor.u32 %v307, %v303
        %v309 = vrot.slane %v308, 4
        %v311 = vshll.u32 %v244, 16
        %v313 = vrot.slane %v311, 5
        %v314 = vsel %vm266, %v309, %v313
        %v316 = vshrl.u32 %v245, 16
        %v318 = vrot.slane %v316, 4
        %v319 = vshll.u32 %v245, 16
        %v321 = vrot.slane %v319, 5
        %v322 = vor.u32 %v318, %v321
        %v323 = vrot.slane %v322, 4
        %v325 = vshll.u32 %v246, 16
        %v327 = vrot.slane %v325, 5
        %v328 = vsel %vm266, %v323, %v327
        %v329 = vshrl.u32 %v246, 16
        %v331 = vrot.slane %v329, 4
        %v332 = vor.u32 %v331, %v327
        %v333 = vrot.slane %v332, 4
        %v335 = vshll.u32 %v247, 16
        %v337 = vrot.slane %v335, 5
        %v338 = vsel %vm266, %v333, %v337
        %v340 = vshrl.u32 %v248, 16
        %v342 = vrot.slane %v340, 4
        %v343 = vshll.u32 %v248, 16
        %v345 = vrot.slane %v343, 5
        %v346 = vor.u32 %v342, %v345
        %v347 = vrot.slane %v346, 4
        %v349 = vshll.u32 %v249, 16
        %v351 = vrot.slane %v349, 5
        %v352 = vsel %vm266, %v347, %v351
        %v353 = vshrl.u32 %v249, 16
        %v355 = vrot.slane %v353, 4
        %v356 = vor.u32 %v355, %v351
        %v357 = vrot.slane %v356, 4
        %v359 = vshll.u32 %v250, 16
        %v361 = vrot.slane %v359, 5
        %v362 = vsel %vm266, %v357, %v361
        %v364 = vshrl.u32 %v251, 16
        %v366 = vrot.slane %v364, 4
        %v367 = vshll.u32 %v251, 16
        %v369 = vrot.slane %v367, 5
        %v370 = vor.u32 %v366, %v369
        %v371 = vrot.slane %v370, 4
        %v373 = vshll.u32 %v252, 16
        %v375 = vrot.slane %v373, 5
        %v376 = vsel %vm266, %v371, %v375
        %v377 = vshrl.u32 %v252, 16
        %v379 = vrot.slane %v377, 4
        %v380 = vor.u32 %v379, %v375
        %v381 = vrot.slane %v380, 4
        %v383 = vshll.u32 %v253, 16
        %v385 = vrot.slane %v383, 5
        %v386 = vsel %vm266, %v381, %v385
        %v388 = vshrl.u32 %v254, 16
        %v390 = vrot.slane %v388, 4
        %v391 = vshll.u32 %v254, 16
        %v393 = vrot.slane %v391, 5
        %v394 = vor.u32 %v390, %v393
        %v395 = vrot.slane %v394, 4
        %v397 = vshll.u32 %v255, 16
        %v399 = vrot.slane %v397, 5
        %v400 = vsel %vm266, %v395, %v399
        %v401 = vshrl.u32 %v255, 16
        %v403 = vrot.slane %v401, 4
        %v404 = vor.u32 %v403, %v399
        %v405 = vrot.slane %v404, 4
        %v407 = vshll.u32 %v256, 16
        %v409 = vrot.slane %v407, 5
        %v410 = vsel %vm266, %v405, %v409
        %v412 = vshrl.u32 %v257, 16
        %v414 = vrot.slane %v412, 4
        %v415 = vshll.u32 %v257, 16
        %v417 = vrot.slane %v415, 5
        %v418 = vor.u32 %v414, %v417
        %v419 = vrot.slane %v418, 4
        %v421 = vshll.u32 %v258, 16
        %v423 = vrot.slane %v421, 5
        %v424 = vsel %vm266, %v419, %v423
        %v425 = vshrl.u32 %v258, 16
        %v427 = vrot.slane %v425, 4
        %v428 = vor.u32 %v427, %v423
        %v429 = vrot.slane %v428, 4
        %v431 = vshll.u32 %v259, 16
        %v433 = vrot.slane %v431, 5
        %v434 = vsel %vm266, %v429, %v433
        %v436 = vshrl.u32 %v260, 16
        %v438 = vrot.slane %v436, 4
        %v439 = vshll.u32 %v260, 16
        %v441 = vrot.slane %v439, 5
        %v442 = vor.u32 %v438, %v441
        %v443 = vrot.slane %v442, 4
        %v445 = vshll.u32 %v261, 16
        %v447 = vrot.slane %v445, 5
        %v448 = vsel %vm266, %v443, %v447
        %v449 = vshrl.u32 %v261, 16
        %v451 = vrot.slane %v449, 4
        %v452 = vor.u32 %v451, %v447
        %v453 = vrot.slane %v452, 4
        %v455 = vshll.u32 %v262, 16
        %v457 = vrot.slane %v455, 5
        %v458 = vsel %vm266, %v453, %v457
        %v459 = vld [vmem:[%s1] sm:$0xc]
        %v460 = vunpack.c.l.b16 %v280
        %v461 = vunpack.c.l.b16 %v290
        %v462 = vunpack.c.l.b16 %v304
        %v463 = vunpack.c.l.b16 %v314
        %v464 = vunpack.c.l.b16 %v328
        %v465 = vunpack.c.l.b16 %v338
        %v466 = vunpack.c.l.b16 %v352
        %v467 = vunpack.c.l.b16 %v362
        %v468 = vunpack.c.l.b16 %v376
        %v469 = vunpack.c.l.b16 %v386
        %v470 = vunpack.c.l.b16 %v400
        %v471 = vunpack.c.l.b16 %v410
        %v472 = vunpack.c.l.b16 %v424
        %v473 = vunpack.c.l.b16 %v434
        %v474 = vunpack.c.l.b16 %v448
        %v475 = vunpack.c.l.b16 %v458
        %v476 = vpack.c.b16 %v461, %v460
        %v477 = vpack.c.b16 %v463, %v462
        %v478 = vpack.c.b16 %v465, %v464
        %v479 = vpack.c.b16 %v467, %v466
        %v480 = vpack.c.b16 %v469, %v468
        %v481 = vpack.c.b16 %v471, %v470
        %v482 = vpack.c.b16 %v473, %v472
        %v483 = vpack.c.b16 %v475, %v474
        %v485 = vunpack.c.l.b16 %v459
        %v486 = vpack.c.b16 %v485, %v485
        %v487 = vrot.slane %v486, 2
        %vm488 = vcmask 31744
        %v490 = vsel %vm488, %v476, 0
        %v493 = vsel %vm488, %v477, 0
        %v496 = vsel %vm488, %v478, 0
        %v499 = vsel %vm488, %v479, 0
        %v502 = vsel %vm488, %v480, 0
        %v505 = vsel %vm488, %v481, 0
        %v508 = vsel %vm488, %v482, 0
        %v511 = vsel %vm488, %v483, 0
        %vm513 = vcmask 1041408
        %v515 = vsel %vm513, %v487, 0
        %517 = vmatpush.bf16.msra.mxu0 0
        %518 = vmatpush.bf16.msra.mxu0 0
        %519 = vmatpush.bf16.msra.mxu0 0
        %520 = vmatpush.bf16.msra.mxu0 0
        %521 = vmatpush.bf16.msra.mxu0 0
        %522 = vmatpush.bf16.msra.mxu0 0
        %523 = vmatpush.bf16.msra.mxu0 0
        %524 = vmatpush.bf16.msra.mxu0 %v515
        %525 = vmatmul.bf16.gmra.mxu0 %v490
        %v526 = vpop.f32.mrf.mxu0
        %v527 = vadd.f32 0.0, %v526
        %v528 = vpop.f32.mrf.mxu0
        %v529 = vadd.f32 0.0, %v528
        %530 = vmatmul.bf16.gmra.mxu0 %v493
        %v531 = vpop.f32.mrf.mxu0
        %v532 = vadd.f32 0.0, %v531
        %v533 = vpop.f32.mrf.mxu0
        %v534 = vadd.f32 0.0, %v533
        %535 = vmatmul.bf16.gmra.mxu0 %v496
        %v536 = vpop.f32.mrf.mxu0
        %v537 = vadd.f32 0.0, %v536
        %v538 = vpop.f32.mrf.mxu0
        %v539 = vadd.f32 0.0, %v538
        %540 = vmatmul.bf16.gmra.mxu0 %v499
        %v541 = vpop.f32.mrf.mxu0
        %v542 = vadd.f32 0.0, %v541
        %v543 = vpop.f32.mrf.mxu0
        %v544 = vadd.f32 0.0, %v543
        %545 = vmatmul.bf16.gmra.mxu0 %v502
        %v546 = vpop.f32.mrf.mxu0
        %v547 = vadd.f32 0.0, %v546
        %v548 = vpop.f32.mrf.mxu0
        %v549 = vadd.f32 0.0, %v548
        %550 = vmatmul.bf16.gmra.mxu0 %v505
        %v551 = vpop.f32.mrf.mxu0
        %v552 = vadd.f32 0.0, %v551
        %v553 = vpop.f32.mrf.mxu0
        %v554 = vadd.f32 0.0, %v553
        %555 = vmatmul.bf16.gmra.mxu0 %v508
        %v556 = vpop.f32.mrf.mxu0
        %v557 = vadd.f32 0.0, %v556
        %v558 = vpop.f32.mrf.mxu0
        %v559 = vadd.f32 0.0, %v558
        %560 = vmatmul.bf16.gmra.mxu0 %v511
        %v561 = vpop.f32.mrf.mxu0
        %v562 = vadd.f32 0.0, %v561
        %v563 = vpop.f32.mrf.mxu0
        %v564 = vadd.f32 0.0, %v563
        %565 = vdwg.mxu0
        %v582 = vunpack.c.l.b16 %v239
        %v583 = vunpack.c.l.b16 %v240
        %v584 = vunpack.c.l.b16 %v242
        %v585 = vunpack.c.l.b16 %v243
        %v586 = vunpack.c.l.b16 %v245
        %v587 = vunpack.c.l.b16 %v246
        %v588 = vunpack.c.l.b16 %v248
        %v589 = vunpack.c.l.b16 %v249
        %v590 = vunpack.c.l.b16 %v251
        %v591 = vunpack.c.l.b16 %v252
        %v592 = vunpack.c.l.b16 %v254
        %v593 = vunpack.c.l.b16 %v255
        %v594 = vunpack.c.l.b16 %v257
        %v595 = vunpack.c.l.b16 %v258
        %v596 = vunpack.c.l.b16 %v260
        %v597 = vunpack.c.l.b16 %v261
        %v598 = vpack.c.b16 %v583, %v582
        %v599 = vpack.c.b16 %v585, %v584
        %v600 = vpack.c.b16 %v587, %v586
        %v601 = vpack.c.b16 %v589, %v588
        %v602 = vpack.c.b16 %v591, %v590
        %v603 = vpack.c.b16 %v593, %v592
        %v604 = vpack.c.b16 %v595, %v594
        %v605 = vpack.c.b16 %v597, %v596
        %v607 = vsel %vm488, %v598, 0
        %v610 = vsel %vm488, %v599, 0
        %v613 = vsel %vm488, %v600, 0
        %v616 = vsel %vm488, %v601, 0
        %v619 = vsel %vm488, %v602, 0
        %v622 = vsel %vm488, %v603, 0
        %v625 = vsel %vm488, %v604, 0
        %v628 = vsel %vm488, %v605, 0
        %v631 = vsel %vm513, %v263, 0
        %633 = vmatpush.bf16.msra.mxu0 0
        %634 = vmatpush.bf16.msra.mxu0 0
        %635 = vmatpush.bf16.msra.mxu0 0
        %636 = vmatpush.bf16.msra.mxu0 0
        %637 = vmatpush.bf16.msra.mxu0 0
        %638 = vmatpush.bf16.msra.mxu0 0
        %639 = vmatpush.bf16.msra.mxu0 0
        %640 = vmatpush.bf16.msra.mxu0 %v631
        %641 = vmatmul.bf16.gmra.mxu0 %v607
        %v642 = vpop.f32.mrf.mxu0
        %v643 = vadd.f32 %v527, %v642
        %v644 = vpop.f32.mrf.mxu0
        %v645 = vadd.f32 %v529, %v644
        %646 = vmatmul.bf16.gmra.mxu0 %v610
        %v647 = vpop.f32.mrf.mxu0
        %v648 = vadd.f32 %v532, %v647
        %v649 = vpop.f32.mrf.mxu0
        %v650 = vadd.f32 %v534, %v649
        %651 = vmatmul.bf16.gmra.mxu0 %v613
        %v652 = vpop.f32.mrf.mxu0
        %v653 = vadd.f32 %v537, %v652
        %v654 = vpop.f32.mrf.mxu0
        %v655 = vadd.f32 %v539, %v654
        %656 = vmatmul.bf16.gmra.mxu0 %v616
        %v657 = vpop.f32.mrf.mxu0
        %v658 = vadd.f32 %v542, %v657
        %v659 = vpop.f32.mrf.mxu0
        %v660 = vadd.f32 %v544, %v659
        %661 = vmatmul.bf16.gmra.mxu0 %v619
        %v662 = vpop.f32.mrf.mxu0
        %v663 = vadd.f32 %v547, %v662
        %v664 = vpop.f32.mrf.mxu0
        %v665 = vadd.f32 %v549, %v664
        %666 = vmatmul.bf16.gmra.mxu0 %v622
        %v667 = vpop.f32.mrf.mxu0
        %v668 = vadd.f32 %v552, %v667
        %v669 = vpop.f32.mrf.mxu0
        %v670 = vadd.f32 %v554, %v669
        %671 = vmatmul.bf16.gmra.mxu0 %v625
        %v672 = vpop.f32.mrf.mxu0
        %v673 = vadd.f32 %v557, %v672
        %v674 = vpop.f32.mrf.mxu0
        %v675 = vadd.f32 %v559, %v674
        %676 = vmatmul.bf16.gmra.mxu0 %v628
        %v677 = vpop.f32.mrf.mxu0
        %v678 = vadd.f32 %v562, %v677
        %v679 = vpop.f32.mrf.mxu0
        %v680 = vadd.f32 %v564, %v679
        %681 = vdwg.mxu0
        %vm690 = vcmask 1042432
        %vm691 = vcmask 1046532
        %vm692 = vmor %vm690, %vm691
        %v693 = vrot.slane %v239, 5
        %v694 = vrot.slane %v693, 4
        %v695 = vrot.slane %v240, 5
        %v696 = vsel %vm692, %v694, %v695
        %v697 = vrot.slane %v695, 4
        %v698 = vrot.slane %v241, 5
        %v699 = vsel %vm692, %v697, %v698
        %v700 = vrot.slane %v242, 5
        %v701 = vrot.slane %v700, 4
        %v702 = vrot.slane %v243, 5
        %v703 = vsel %vm692, %v701, %v702
        %v704 = vrot.slane %v702, 4
        %v705 = vrot.slane %v244, 5
        %v706 = vsel %vm692, %v704, %v705
        %v707 = vrot.slane %v245, 5
        %v708 = vrot.slane %v707, 4
        %v709 = vrot.slane %v246, 5
        %v710 = vsel %vm692, %v708, %v709
        %v711 = vrot.slane %v709, 4
        %v712 = vrot.slane %v247, 5
        %v713 = vsel %vm692, %v711, %v712
        %v714 = vrot.slane %v248, 5
        %v715 = vrot.slane %v714, 4
        %v716 = vrot.slane %v249, 5
        %v717 = vsel %vm692, %v715, %v716
        %v718 = vrot.slane %v716, 4
        %v719 = vrot.slane %v250, 5
        %v720 = vsel %vm692, %v718, %v719
        %v721 = vrot.slane %v251, 5
        %v722 = vrot.slane %v721, 4
        %v723 = vrot.slane %v252, 5
        %v724 = vsel %vm692, %v722, %v723
        %v725 = vrot.slane %v723, 4
        %v726 = vrot.slane %v253, 5
        %v727 = vsel %vm692, %v725, %v726
        %v728 = vrot.slane %v254, 5
        %v729 = vrot.slane %v728, 4
        %v730 = vrot.slane %v255, 5
        %v731 = vsel %vm692, %v729, %v730
        %v732 = vrot.slane %v730, 4
        %v733 = vrot.slane %v256, 5
        %v734 = vsel %vm692, %v732, %v733
        %v735 = vrot.slane %v257, 5
        %v736 = vrot.slane %v735, 4
        %v737 = vrot.slane %v258, 5
        %v738 = vsel %vm692, %v736, %v737
        %v739 = vrot.slane %v737, 4
        %v740 = vrot.slane %v259, 5
        %v741 = vsel %vm692, %v739, %v740
        %v742 = vrot.slane %v260, 5
        %v743 = vrot.slane %v742, 4
        %v744 = vrot.slane %v261, 5
        %v745 = vsel %vm692, %v743, %v744
        %v746 = vrot.slane %v744, 4
        %v747 = vrot.slane %v262, 5
        %v748 = vsel %vm692, %v746, %v747
        %v749 = vld [vmem:[%s1 + $0x4] sm:$0x3]
        %v750 = vunpack.c.l.b16 %v696
        %v751 = vunpack.c.l.b16 %v699
        %v752 = vunpack.c.l.b16 %v703
        %v753 = vunpack.c.l.b16 %v706
        %v754 = vunpack.c.l.b16 %v710
        %v755 = vunpack.c.l.b16 %v713
        %v756 = vunpack.c.l.b16 %v717
        %v757 = vunpack.c.l.b16 %v720
        %v758 = vunpack.c.l.b16 %v724
        %v759 = vunpack.c.l.b16 %v727
        %v760 = vunpack.c.l.b16 %v731
        %v761 = vunpack.c.l.b16 %v734
        %v762 = vunpack.c.l.b16 %v738
        %v763 = vunpack.c.l.b16 %v741
        %v764 = vunpack.c.l.b16 %v745
        %v765 = vunpack.c.l.b16 %v748
        %v766 = vpack.c.b16 %v751, %v750
        %v767 = vpack.c.b16 %v753, %v752
        %v768 = vpack.c.b16 %v755, %v754
        %v769 = vpack.c.b16 %v757, %v756
        %v770 = vpack.c.b16 %v759, %v758
        %v771 = vpack.c.b16 %v761, %v760
        %v772 = vpack.c.b16 %v763, %v762
        %v773 = vpack.c.b16 %v765, %v764
        %v775 = vsel %vm488, %v766, 0
        %v778 = vsel %vm488, %v767, 0
        %v781 = vsel %vm488, %v768, 0
        %v784 = vsel %vm488, %v769, 0
        %v787 = vsel %vm488, %v770, 0
        %v790 = vsel %vm488, %v771, 0
        %v793 = vsel %vm488, %v772, 0
        %v796 = vsel %vm488, %v773, 0
        %v799 = vsel %vm513, %v749, 0
        %801 = vmatpush.bf16.msra.mxu0 0
        %802 = vmatpush.bf16.msra.mxu0 0
        %803 = vmatpush.bf16.msra.mxu0 0
        %804 = vmatpush.bf16.msra.mxu0 0
        %805 = vmatpush.bf16.msra.mxu0 0
        %806 = vmatpush.bf16.msra.mxu0 0
        %807 = vmatpush.bf16.msra.mxu0 0
        %808 = vmatpush.bf16.msra.mxu0 %v799
        %809 = vmatmul.bf16.gmra.mxu0 %v775
        %v810 = vpop.f32.mrf.mxu0
        %v811 = vadd.f32 0.0, %v810
        %v812 = vpop.f32.mrf.mxu0
        %v813 = vadd.f32 0.0, %v812
        %814 = vmatmul.bf16.gmra.mxu0 %v778
        %v815 = vpop.f32.mrf.mxu0
        %v816 = vadd.f32 0.0, %v815
        %v817 = vpop.f32.mrf.mxu0
        %v818 = vadd.f32 0.0, %v817
        %819 = vmatmul.bf16.gmra.mxu0 %v781
        %v820 = vpop.f32.mrf.mxu0
        %v821 = vadd.f32 0.0, %v820
        %v822 = vpop.f32.mrf.mxu0
        %v823 = vadd.f32 0.0, %v822
        %824 = vmatmul.bf16.gmra.mxu0 %v784
        %v825 = vpop.f32.mrf.mxu0
        %v826 = vadd.f32 0.0, %v825
        %v827 = vpop.f32.mrf.mxu0
        %v828 = vadd.f32 0.0, %v827
        %829 = vmatmul.bf16.gmra.mxu0 %v787
        %v830 = vpop.f32.mrf.mxu0
        %v831 = vadd.f32 0.0, %v830
        %v832 = vpop.f32.mrf.mxu0
        %v833 = vadd.f32 0.0, %v832
        %834 = vmatmul.bf16.gmra.mxu0 %v790
        %v835 = vpop.f32.mrf.mxu0
        %v836 = vadd.f32 0.0, %v835
        %v837 = vpop.f32.mrf.mxu0
        %v838 = vadd.f32 0.0, %v837
        %839 = vmatmul.bf16.gmra.mxu0 %v793
        %v840 = vpop.f32.mrf.mxu0
        %v841 = vadd.f32 0.0, %v840
        %v842 = vpop.f32.mrf.mxu0
        %v843 = vadd.f32 0.0, %v842
        %844 = vmatmul.bf16.gmra.mxu0 %v796
        %v845 = vpop.f32.mrf.mxu0
        %v846 = vadd.f32 0.0, %v845
        %v847 = vpop.f32.mrf.mxu0
        %v848 = vadd.f32 0.0, %v847
        %849 = vdwg.mxu0
        %v850 = vadd.f32 %v643, %v811
        %v851 = vadd.f32 %v645, %v813
        %v852 = vadd.f32 %v648, %v816
        %v853 = vadd.f32 %v650, %v818
        %v854 = vadd.f32 %v653, %v821
        %v855 = vadd.f32 %v655, %v823
        %v856 = vadd.f32 %v658, %v826
        %v857 = vadd.f32 %v660, %v828
        %v858 = vadd.f32 %v663, %v831
        %v859 = vadd.f32 %v665, %v833
        %v860 = vadd.f32 %v668, %v836
        %v861 = vadd.f32 %v670, %v838
        %v862 = vadd.f32 %v673, %v841
        %v863 = vadd.f32 %v675, %v843
        %v864 = vadd.f32 %v678, %v846
        %v865 = vadd.f32 %v680, %v848
        %s866 = sadd.s32 %s235, 1
        %s867 = smul.u32 %s866, 3
        %s868 = smul.addr %s867, 4
        %s869 = scalar_lea.vmem %s214, %s868
        %v870 = vld [vmem:[%s869] sm:$0xf]
        %v871 = vld [vmem:[%s869 + $0x4] sm:$0xf]
        %v872 = vld [vmem:[%s869 + $0x8] sm:$0x1]
        %v873 = vld [vmem:[%s869 + $0xc] sm:$0xf]
        %v874 = vld [vmem:[%s869 + $0x10] sm:$0xf]
        %v875 = vld [vmem:[%s869 + $0x14] sm:$0x1]
        %v876 = vld [vmem:[%s869 + $0x18] sm:$0xf]
        %v877 = vld [vmem:[%s869 + $0x1c] sm:$0xf]
        %v878 = vld [vmem:[%s869 + $0x20] sm:$0x1]
        %v879 = vld [vmem:[%s869 + $0x24] sm:$0xf]
        %v880 = vld [vmem:[%s869 + $0x28] sm:$0xf]
        %v881 = vld [vmem:[%s869 + $0x2c] sm:$0x1]
        %v882 = vld [vmem:[%s869 + $0x30] sm:$0xf]
        %v883 = vld [vmem:[%s869 + $0x34] sm:$0xf]
        %v884 = vld [vmem:[%s869 + $0x38] sm:$0x1]
        %v885 = vld [vmem:[%s869 + $0x3c] sm:$0xf]
        %v886 = vld [vmem:[%s869 + $0x40] sm:$0xf]
        %v887 = vld [vmem:[%s869 + $0x44] sm:$0x1]
        %v888 = vld [vmem:[%s869 + $0x48] sm:$0xf]
        %v889 = vld [vmem:[%s869 + $0x4c] sm:$0xf]
        %v890 = vld [vmem:[%s869 + $0x50] sm:$0x1]
        %v891 = vld [vmem:[%s869 + $0x54] sm:$0xf]
        %v892 = vld [vmem:[%s869 + $0x58] sm:$0xf]
        %v893 = vld [vmem:[%s869 + $0x5c] sm:$0x1]
        %v894 = vld [vmem:[%s1 + $0x4] sm:$0xc]
        %v911 = vunpack.c.l.b16 %v870
        %v912 = vunpack.c.l.b16 %v871
        %v913 = vunpack.c.l.b16 %v873
        %v914 = vunpack.c.l.b16 %v874
        %v915 = vunpack.c.l.b16 %v876
        %v916 = vunpack.c.l.b16 %v877
        %v917 = vunpack.c.l.b16 %v879
        %v918 = vunpack.c.l.b16 %v880
        %v919 = vunpack.c.l.b16 %v882
        %v920 = vunpack.c.l.b16 %v883
        %v921 = vunpack.c.l.b16 %v885
        %v922 = vunpack.c.l.b16 %v886
        %v923 = vunpack.c.l.b16 %v888
        %v924 = vunpack.c.l.b16 %v889
        %v925 = vunpack.c.l.b16 %v891
        %v926 = vunpack.c.l.b16 %v892
        %v927 = vpack.c.b16 %v912, %v911
        %v928 = vpack.c.b16 %v914, %v913
        %v929 = vpack.c.b16 %v916, %v915
        %v930 = vpack.c.b16 %v918, %v917
        %v931 = vpack.c.b16 %v920, %v919
        %v932 = vpack.c.b16 %v922, %v921
        %v933 = vpack.c.b16 %v924, %v923
        %v934 = vpack.c.b16 %v926, %v925
        %v936 = vunpack.c.l.b16 %v894
        %v937 = vpack.c.b16 %v936, %v936
        %v938 = vrot.slane %v937, 2
        %v940 = vsel %vm488, %v927, 0
        %v943 = vsel %vm488, %v928, 0
        %v946 = vsel %vm488, %v929, 0
        %v949 = vsel %vm488, %v930, 0
        %v952 = vsel %vm488, %v931, 0
        %v955 = vsel %vm488, %v932, 0
        %v958 = vsel %vm488, %v933, 0
        %v961 = vsel %vm488, %v934, 0
        %v964 = vsel %vm513, %v938, 0
        %966 = vmatpush.bf16.msra.mxu0 0
        %967 = vmatpush.bf16.msra.mxu0 0
        %968 = vmatpush.bf16.msra.mxu0 0
        %969 = vmatpush.bf16.msra.mxu0 0
        %970 = vmatpush.bf16.msra.mxu0 0
        %971 = vmatpush.bf16.msra.mxu0 0
        %972 = vmatpush.bf16.msra.mxu0 0
        %973 = vmatpush.bf16.msra.mxu0 %v964
        %974 = vmatmul.bf16.gmra.mxu0 %v940
        %v975 = vpop.f32.mrf.mxu0
        %v976 = vadd.f32 0.0, %v975
        %v977 = vpop.f32.mrf.mxu0
        %v978 = vadd.f32 0.0, %v977
        %979 = vmatmul.bf16.gmra.mxu0 %v943
        %v980 = vpop.f32.mrf.mxu0
        %v981 = vadd.f32 0.0, %v980
        %v982 = vpop.f32.mrf.mxu0
        %v983 = vadd.f32 0.0, %v982
        %984 = vmatmul.bf16.gmra.mxu0 %v946
        %v985 = vpop.f32.mrf.mxu0
        %v986 = vadd.f32 0.0, %v985
        %v987 = vpop.f32.mrf.mxu0
        %v988 = vadd.f32 0.0, %v987
        %989 = vmatmul.bf16.gmra.mxu0 %v949
        %v990 = vpop.f32.mrf.mxu0
        %v991 = vadd.f32 0.0, %v990
        %v992 = vpop.f32.mrf.mxu0
        %v993 = vadd.f32 0.0, %v992
        %994 = vmatmul.bf16.gmra.mxu0 %v952
        %v995 = vpop.f32.mrf.mxu0
        %v996 = vadd.f32 0.0, %v995
        %v997 = vpop.f32.mrf.mxu0
        %v998 = vadd.f32 0.0, %v997
        %999 = vmatmul.bf16.gmra.mxu0 %v955
        %v1000 = vpop.f32.mrf.mxu0
        %v1001 = vadd.f32 0.0, %v1000
        %v1002 = vpop.f32.mrf.mxu0
        %v1003 = vadd.f32 0.0, %v1002
        %1004 = vmatmul.bf16.gmra.mxu0 %v958
        %v1005 = vpop.f32.mrf.mxu0
        %v1006 = vadd.f32 0.0, %v1005
        %v1007 = vpop.f32.mrf.mxu0
        %v1008 = vadd.f32 0.0, %v1007
        %1009 = vmatmul.bf16.gmra.mxu0 %v961
        %v1010 = vpop.f32.mrf.mxu0
        %v1011 = vadd.f32 0.0, %v1010
        %v1012 = vpop.f32.mrf.mxu0
        %v1013 = vadd.f32 0.0, %v1012
        %1014 = vdwg.mxu0
        %v1015 = vadd.f32 %v850, %v976
        %v1016 = vadd.f32 %v851, %v978
        %v1017 = vadd.f32 %v852, %v981
        %v1018 = vadd.f32 %v853, %v983
        %v1019 = vadd.f32 %v854, %v986
        %v1020 = vadd.f32 %v855, %v988
        %v1021 = vadd.f32 %v856, %v991
        %v1022 = vadd.f32 %v857, %v993
        %v1023 = vadd.f32 %v858, %v996
        %v1024 = vadd.f32 %v859, %v998
        %v1025 = vadd.f32 %v860, %v1001
        %v1026 = vadd.f32 %v861, %v1003
        %v1027 = vadd.f32 %v862, %v1006
        %v1028 = vadd.f32 %v863, %v1008
        %v1029 = vadd.f32 %v864, %v1011
        %v1030 = vadd.f32 %v865, %v1013
        %v1032 = vshrl.u32 %v870, 16
        %v1034 = vrot.slane %v1032, 4
        %v1035 = vshll.u32 %v870, 16
        %v1037 = vrot.slane %v1035, 5
        %v1038 = vor.u32 %v1034, %v1037
        %v1039 = vrot.slane %v1038, 4
        %v1041 = vshll.u32 %v871, 16
        %v1043 = vrot.slane %v1041, 5
        %v1044 = vsel %vm266, %v1039, %v1043
        %v1045 = vshrl.u32 %v871, 16
        %v1047 = vrot.slane %v1045, 4
        %v1048 = vor.u32 %v1047, %v1043
        %v1049 = vrot.slane %v1048, 4
        %v1051 = vshll.u32 %v872, 16
        %v1053 = vrot.slane %v1051, 5
        %v1054 = vsel %vm266, %v1049, %v1053
        %v1056 = vshrl.u32 %v873, 16
        %v1058 = vrot.slane %v1056, 4
        %v1059 = vshll.u32 %v873, 16
        %v1061 = vrot.slane %v1059, 5
        %v1062 = vor.u32 %v1058, %v1061
        %v1063 = vrot.slane %v1062, 4
        %v1065 = vshll.u32 %v874, 16
        %v1067 = vrot.slane %v1065, 5
        %v1068 = vsel %vm266, %v1063, %v1067
        %v1069 = vshrl.u32 %v874, 16
        %v1071 = vrot.slane %v1069, 4
        %v1072 = vor.u32 %v1071, %v1067
        %v1073 = vrot.slane %v1072, 4
        %v1075 = vshll.u32 %v875, 16
        %v1077 = vrot.slane %v1075, 5
        %v1078 = vsel %vm266, %v1073, %v1077
        %v1080 = vshrl.u32 %v876, 16
        %v1082 = vrot.slane %v1080, 4
        %v1083 = vshll.u32 %v876, 16
        %v1085 = vrot.slane %v1083, 5
        %v1086 = vor.u32 %v1082, %v1085
        %v1087 = vrot.slane %v1086, 4
        %v1089 = vshll.u32 %v877, 16
        %v1091 = vrot.slane %v1089, 5
        %v1092 = vsel %vm266, %v1087, %v1091
        %v1093 = vshrl.u32 %v877, 16
        %v1095 = vrot.slane %v1093, 4
        %v1096 = vor.u32 %v1095, %v1091
        %v1097 = vrot.slane %v1096, 4
        %v1099 = vshll.u32 %v878, 16
        %v1101 = vrot.slane %v1099, 5
        %v1102 = vsel %vm266, %v1097, %v1101
        %v1104 = vshrl.u32 %v879, 16
        %v1106 = vrot.slane %v1104, 4
        %v1107 = vshll.u32 %v879, 16
        %v1109 = vrot.slane %v1107, 5
        %v1110 = vor.u32 %v1106, %v1109
        %v1111 = vrot.slane %v1110, 4
        %v1113 = vshll.u32 %v880, 16
        %v1115 = vrot.slane %v1113, 5
        %v1116 = vsel %vm266, %v1111, %v1115
        %v1117 = vshrl.u32 %v880, 16
        %v1119 = vrot.slane %v1117, 4
        %v1120 = vor.u32 %v1119, %v1115
        %v1121 = vrot.slane %v1120, 4
        %v1123 = vshll.u32 %v881, 16
        %v1125 = vrot.slane %v1123, 5
        %v1126 = vsel %vm266, %v1121, %v1125
        %v1128 = vshrl.u32 %v882, 16
        %v1130 = vrot.slane %v1128, 4
        %v1131 = vshll.u32 %v882, 16
        %v1133 = vrot.slane %v1131, 5
        %v1134 = vor.u32 %v1130, %v1133
        %v1135 = vrot.slane %v1134, 4
        %v1137 = vshll.u32 %v883, 16
        %v1139 = vrot.slane %v1137, 5
        %v1140 = vsel %vm266, %v1135, %v1139
        %v1141 = vshrl.u32 %v883, 16
        %v1143 = vrot.slane %v1141, 4
        %v1144 = vor.u32 %v1143, %v1139
        %v1145 = vrot.slane %v1144, 4
        %v1147 = vshll.u32 %v884, 16
        %v1149 = vrot.slane %v1147, 5
        %v1150 = vsel %vm266, %v1145, %v1149
        %v1152 = vshrl.u32 %v885, 16
        %v1154 = vrot.slane %v1152, 4
        %v1155 = vshll.u32 %v885, 16
        %v1157 = vrot.slane %v1155, 5
        %v1158 = vor.u32 %v1154, %v1157
        %v1159 = vrot.slane %v1158, 4
        %v1161 = vshll.u32 %v886, 16
        %v1163 = vrot.slane %v1161, 5
        %v1164 = vsel %vm266, %v1159, %v1163
        %v1165 = vshrl.u32 %v886, 16
        %v1167 = vrot.slane %v1165, 4
        %v1168 = vor.u32 %v1167, %v1163
        %v1169 = vrot.slane %v1168, 4
        %v1171 = vshll.u32 %v887, 16
        %v1173 = vrot.slane %v1171, 5
        %v1174 = vsel %vm266, %v1169, %v1173
        %v1176 = vshrl.u32 %v888, 16
        %v1178 = vrot.slane %v1176, 4
        %v1179 = vshll.u32 %v888, 16
        %v1181 = vrot.slane %v1179, 5
        %v1182 = vor.u32 %v1178, %v1181
        %v1183 = vrot.slane %v1182, 4
        %v1185 = vshll.u32 %v889, 16
        %v1187 = vrot.slane %v1185, 5
        %v1188 = vsel %vm266, %v1183, %v1187
        %v1189 = vshrl.u32 %v889, 16
        %v1191 = vrot.slane %v1189, 4
        %v1192 = vor.u32 %v1191, %v1187
        %v1193 = vrot.slane %v1192, 4
        %v1195 = vshll.u32 %v890, 16
        %v1197 = vrot.slane %v1195, 5
        %v1198 = vsel %vm266, %v1193, %v1197
        %v1200 = vshrl.u32 %v891, 16
        %v1202 = vrot.slane %v1200, 4
        %v1203 = vshll.u32 %v891, 16
        %v1205 = vrot.slane %v1203, 5
        %v1206 = vor.u32 %v1202, %v1205
        %v1207 = vrot.slane %v1206, 4
        %v1209 = vshll.u32 %v892, 16
        %v1211 = vrot.slane %v1209, 5
        %v1212 = vsel %vm266, %v1207, %v1211
        %v1213 = vshrl.u32 %v892, 16
        %v1215 = vrot.slane %v1213, 4
        %v1216 = vor.u32 %v1215, %v1211
        %v1217 = vrot.slane %v1216, 4
        %v1219 = vshll.u32 %v893, 16
        %v1221 = vrot.slane %v1219, 5
        %v1222 = vsel %vm266, %v1217, %v1221
        %v1223 = vld [vmem:[%s1 + $0x8] sm:$0x3]
        %v1224 = vunpack.c.l.b16 %v1044
        %v1225 = vunpack.c.l.b16 %v1054
        %v1226 = vunpack.c.l.b16 %v1068
        %v1227 = vunpack.c.l.b16 %v1078
        %v1228 = vunpack.c.l.b16 %v1092
        %v1229 = vunpack.c.l.b16 %v1102
        %v1230 = vunpack.c.l.b16 %v1116
        %v1231 = vunpack.c.l.b16 %v1126
        %v1232 = vunpack.c.l.b16 %v1140
        %v1233 = vunpack.c.l.b16 %v1150
        %v1234 = vunpack.c.l.b16 %v1164
        %v1235 = vunpack.c.l.b16 %v1174
        %v1236 = vunpack.c.l.b16 %v1188
        %v1237 = vunpack.c.l.b16 %v1198
        %v1238 = vunpack.c.l.b16 %v1212
        %v1239 = vunpack.c.l.b16 %v1222
        %v1240 = vpack.c.b16 %v1225, %v1224
        %v1241 = vpack.c.b16 %v1227, %v1226
        %v1242 = vpack.c.b16 %v1229, %v1228
        %v1243 = vpack.c.b16 %v1231, %v1230
        %v1244 = vpack.c.b16 %v1233, %v1232
        %v1245 = vpack.c.b16 %v1235, %v1234
        %v1246 = vpack.c.b16 %v1237, %v1236
        %v1247 = vpack.c.b16 %v1239, %v1238
        %v1249 = vsel %vm488, %v1240, 0
        %v1252 = vsel %vm488, %v1241, 0
        %v1255 = vsel %vm488, %v1242, 0
        %v1258 = vsel %vm488, %v1243, 0
        %v1261 = vsel %vm488, %v1244, 0
        %v1264 = vsel %vm488, %v1245, 0
        %v1267 = vsel %vm488, %v1246, 0
        %v1270 = vsel %vm488, %v1247, 0
        %v1273 = vsel %vm513, %v1223, 0
        %1275 = vmatpush.bf16.msra.mxu0 0
        %1276 = vmatpush.bf16.msra.mxu0 0
        %1277 = vmatpush.bf16.msra.mxu0 0
        %1278 = vmatpush.bf16.msra.mxu0 0
        %1279 = vmatpush.bf16.msra.mxu0 0
        %1280 = vmatpush.bf16.msra.mxu0 0
        %1281 = vmatpush.bf16.msra.mxu0 0
        %1282 = vmatpush.bf16.msra.mxu0 %v1273
        %1283 = vmatmul.bf16.gmra.mxu0 %v1249
        %v1284 = vpop.f32.mrf.mxu0
        %v1285 = vadd.f32 0.0, %v1284
        %v1286 = vpop.f32.mrf.mxu0
        %v1287 = vadd.f32 0.0, %v1286
        %1288 = vmatmul.bf16.gmra.mxu0 %v1252
        %v1289 = vpop.f32.mrf.mxu0
        %v1290 = vadd.f32 0.0, %v1289
        %v1291 = vpop.f32.mrf.mxu0
        %v1292 = vadd.f32 0.0, %v1291
        %1293 = vmatmul.bf16.gmra.mxu0 %v1255
        %v1294 = vpop.f32.mrf.mxu0
        %v1295 = vadd.f32 0.0, %v1294
        %v1296 = vpop.f32.mrf.mxu0
        %v1297 = vadd.f32 0.0, %v1296
        %1298 = vmatmul.bf16.gmra.mxu0 %v1258
        %v1299 = vpop.f32.mrf.mxu0
        %v1300 = vadd.f32 0.0, %v1299
        %v1301 = vpop.f32.mrf.mxu0
        %v1302 = vadd.f32 0.0, %v1301
        %1303 = vmatmul.bf16.gmra.mxu0 %v1261
        %v1304 = vpop.f32.mrf.mxu0
        %v1305 = vadd.f32 0.0, %v1304
        %v1306 = vpop.f32.mrf.mxu0
        %v1307 = vadd.f32 0.0, %v1306
        %1308 = vmatmul.bf16.gmra.mxu0 %v1264
        %v1309 = vpop.f32.mrf.mxu0
        %v1310 = vadd.f32 0.0, %v1309
        %v1311 = vpop.f32.mrf.mxu0
        %v1312 = vadd.f32 0.0, %v1311
        %1313 = vmatmul.bf16.gmra.mxu0 %v1267
        %v1314 = vpop.f32.mrf.mxu0
        %v1315 = vadd.f32 0.0, %v1314
        %v1316 = vpop.f32.mrf.mxu0
        %v1317 = vadd.f32 0.0, %v1316
        %1318 = vmatmul.bf16.gmra.mxu0 %v1270
        %v1319 = vpop.f32.mrf.mxu0
        %v1320 = vadd.f32 0.0, %v1319
        %v1321 = vpop.f32.mrf.mxu0
        %v1322 = vadd.f32 0.0, %v1321
        %1323 = vdwg.mxu0
        %v1324 = vadd.f32 %v1015, %v1285
        %v1325 = vadd.f32 %v1016, %v1287
        %v1326 = vadd.f32 %v1017, %v1290
        %v1327 = vadd.f32 %v1018, %v1292
        %v1328 = vadd.f32 %v1019, %v1295
        %v1329 = vadd.f32 %v1020, %v1297
        %v1330 = vadd.f32 %v1021, %v1300
        %v1331 = vadd.f32 %v1022, %v1302
        %v1332 = vadd.f32 %v1023, %v1305
        %v1333 = vadd.f32 %v1024, %v1307
        %v1334 = vadd.f32 %v1025, %v1310
        %v1335 = vadd.f32 %v1026, %v1312
        %v1336 = vadd.f32 %v1027, %v1315
        %v1337 = vadd.f32 %v1028, %v1317
        %v1338 = vadd.f32 %v1029, %v1320
        %v1339 = vadd.f32 %v1030, %v1322
        %v1348 = vrot.slane %v870, 5
        %v1349 = vrot.slane %v1348, 4
        %v1350 = vrot.slane %v871, 5
        %v1351 = vsel %vm692, %v1349, %v1350
        %v1352 = vrot.slane %v1350, 4
        %v1353 = vrot.slane %v872, 5
        %v1354 = vsel %vm692, %v1352, %v1353
        %v1355 = vrot.slane %v873, 5
        %v1356 = vrot.slane %v1355, 4
        %v1357 = vrot.slane %v874, 5
        %v1358 = vsel %vm692, %v1356, %v1357
        %v1359 = vrot.slane %v1357, 4
        %v1360 = vrot.slane %v875, 5
        %v1361 = vsel %vm692, %v1359, %v1360
        %v1362 = vrot.slane %v876, 5
        %v1363 = vrot.slane %v1362, 4
        %v1364 = vrot.slane %v877, 5
        %v1365 = vsel %vm692, %v1363, %v1364
        %v1366 = vrot.slane %v1364, 4
        %v1367 = vrot.slane %v878, 5
        %v1368 = vsel %vm692, %v1366, %v1367
        %v1369 = vrot.slane %v879, 5
        %v1370 = vrot.slane %v1369, 4
        %v1371 = vrot.slane %v880, 5
        %v1372 = vsel %vm692, %v1370, %v1371
        %v1373 = vrot.slane %v1371, 4
        %v1374 = vrot.slane %v881, 5
        %v1375 = vsel %vm692, %v1373, %v1374
        %v1376 = vrot.slane %v882, 5
        %v1377 = vrot.slane %v1376, 4
        %v1378 = vrot.slane %v883, 5
        %v1379 = vsel %vm692, %v1377, %v1378
        %v1380 = vrot.slane %v1378, 4
        %v1381 = vrot.slane %v884, 5
        %v1382 = vsel %vm692, %v1380, %v1381
        %v1383 = vrot.slane %v885, 5
        %v1384 = vrot.slane %v1383, 4
        %v1385 = vrot.slane %v886, 5
        %v1386 = vsel %vm692, %v1384, %v1385
        %v1387 = vrot.slane %v1385, 4
        %v1388 = vrot.slane %v887, 5
        %v1389 = vsel %vm692, %v1387, %v1388
        %v1390 = vrot.slane %v888, 5
        %v1391 = vrot.slane %v1390, 4
        %v1392 = vrot.slane %v889, 5
        %v1393 = vsel %vm692, %v1391, %v1392
        %v1394 = vrot.slane %v1392, 4
        %v1395 = vrot.slane %v890, 5
        %v1396 = vsel %vm692, %v1394, %v1395
        %v1397 = vrot.slane %v891, 5
        %v1398 = vrot.slane %v1397, 4
        %v1399 = vrot.slane %v892, 5
        %v1400 = vsel %vm692, %v1398, %v1399
        %v1401 = vrot.slane %v1399, 4
        %v1402 = vrot.slane %v893, 5
        %v1403 = vsel %vm692, %v1401, %v1402
        %v1404 = vld [vmem:[%s1 + $0x8] sm:$0xc]
        %v1405 = vunpack.c.l.b16 %v1351
        %v1406 = vunpack.c.l.b16 %v1354
        %v1407 = vunpack.c.l.b16 %v1358
        %v1408 = vunpack.c.l.b16 %v1361
        %v1409 = vunpack.c.l.b16 %v1365
        %v1410 = vunpack.c.l.b16 %v1368
        %v1411 = vunpack.c.l.b16 %v1372
        %v1412 = vunpack.c.l.b16 %v1375
        %v1413 = vunpack.c.l.b16 %v1379
        %v1414 = vunpack.c.l.b16 %v1382
        %v1415 = vunpack.c.l.b16 %v1386
        %v1416 = vunpack.c.l.b16 %v1389
        %v1417 = vunpack.c.l.b16 %v1393
        %v1418 = vunpack.c.l.b16 %v1396
        %v1419 = vunpack.c.l.b16 %v1400
        %v1420 = vunpack.c.l.b16 %v1403
        %v1421 = vpack.c.b16 %v1406, %v1405
        %v1422 = vpack.c.b16 %v1408, %v1407
        %v1423 = vpack.c.b16 %v1410, %v1409
        %v1424 = vpack.c.b16 %v1412, %v1411
        %v1425 = vpack.c.b16 %v1414, %v1413
        %v1426 = vpack.c.b16 %v1416, %v1415
        %v1427 = vpack.c.b16 %v1418, %v1417
        %v1428 = vpack.c.b16 %v1420, %v1419
        %v1430 = vunpack.c.l.b16 %v1404
        %v1431 = vpack.c.b16 %v1430, %v1430
        %v1432 = vrot.slane %v1431, 2
        %v1434 = vsel %vm488, %v1421, 0
        %v1437 = vsel %vm488, %v1422, 0
        %v1440 = vsel %vm488, %v1423, 0
        %v1443 = vsel %vm488, %v1424, 0
        %v1446 = vsel %vm488, %v1425, 0
        %v1449 = vsel %vm488, %v1426, 0
        %v1452 = vsel %vm488, %v1427, 0
        %v1455 = vsel %vm488, %v1428, 0
        %v1458 = vsel %vm513, %v1432, 0
        %1460 = vmatpush.bf16.msra.mxu0 0
        %1461 = vmatpush.bf16.msra.mxu0 0
        %1462 = vmatpush.bf16.msra.mxu0 0
        %1463 = vmatpush.bf16.msra.mxu0 0
        %1464 = vmatpush.bf16.msra.mxu0 0
        %1465 = vmatpush.bf16.msra.mxu0 0
        %1466 = vmatpush.bf16.msra.mxu0 0
        %1467 = vmatpush.bf16.msra.mxu0 %v1458
        %1468 = vmatmul.bf16.gmra.mxu0 %v1434
        %v1469 = vpop.f32.mrf.mxu0
        %v1470 = vadd.f32 0.0, %v1469
        %v1471 = vpop.f32.mrf.mxu0
        %v1472 = vadd.f32 0.0, %v1471
        %1473 = vmatmul.bf16.gmra.mxu0 %v1437
        %v1474 = vpop.f32.mrf.mxu0
        %v1475 = vadd.f32 0.0, %v1474
        %v1476 = vpop.f32.mrf.mxu0
        %v1477 = vadd.f32 0.0, %v1476
        %1478 = vmatmul.bf16.gmra.mxu0 %v1440
        %v1479 = vpop.f32.mrf.mxu0
        %v1480 = vadd.f32 0.0, %v1479
        %v1481 = vpop.f32.mrf.mxu0
        %v1482 = vadd.f32 0.0, %v1481
        %1483 = vmatmul.bf16.gmra.mxu0 %v1443
        %v1484 = vpop.f32.mrf.mxu0
        %v1485 = vadd.f32 0.0, %v1484
        %v1486 = vpop.f32.mrf.mxu0
        %v1487 = vadd.f32 0.0, %v1486
        %1488 = vmatmul.bf16.gmra.mxu0 %v1446
        %v1489 = vpop.f32.mrf.mxu0
        %v1490 = vadd.f32 0.0, %v1489
        %v1491 = vpop.f32.mrf.mxu0
        %v1492 = vadd.f32 0.0, %v1491
        %1493 = vmatmul.bf16.gmra.mxu0 %v1449
        %v1494 = vpop.f32.mrf.mxu0
        %v1495 = vadd.f32 0.0, %v1494
        %v1496 = vpop.f32.mrf.mxu0
        %v1497 = vadd.f32 0.0, %v1496
        %1498 = vmatmul.bf16.gmra.mxu0 %v1452
        %v1499 = vpop.f32.mrf.mxu0
        %v1500 = vadd.f32 0.0, %v1499
        %v1501 = vpop.f32.mrf.mxu0
        %v1502 = vadd.f32 0.0, %v1501
        %1503 = vmatmul.bf16.gmra.mxu0 %v1455
        %v1504 = vpop.f32.mrf.mxu0
        %v1505 = vadd.f32 0.0, %v1504
        %v1506 = vpop.f32.mrf.mxu0
        %v1507 = vadd.f32 0.0, %v1506
        %1508 = vdwg.mxu0
        %v1509 = vadd.f32 %v1324, %v1470
        %v1510 = vadd.f32 %v1325, %v1472
        %v1511 = vadd.f32 %v1326, %v1475
        %v1512 = vadd.f32 %v1327, %v1477
        %v1513 = vadd.f32 %v1328, %v1480
        %v1514 = vadd.f32 %v1329, %v1482
        %v1515 = vadd.f32 %v1330, %v1485
        %v1516 = vadd.f32 %v1331, %v1487
        %v1517 = vadd.f32 %v1332, %v1490
        %v1518 = vadd.f32 %v1333, %v1492
        %v1519 = vadd.f32 %v1334, %v1495
        %v1520 = vadd.f32 %v1335, %v1497
        %v1521 = vadd.f32 %v1336, %v1500
        %v1522 = vadd.f32 %v1337, %v1502
        %v1523 = vadd.f32 %v1338, %v1505
        %v1524 = vadd.f32 %v1339, %v1507
        %s1525 = sadd.s32 %s235, 2
        %s1526 = smul.u32 %s1525, 3
        %s1527 = smul.addr %s1526, 4
        %s1528 = scalar_lea.vmem %s214, %s1527
        %v1529 = vld [vmem:[%s1528] sm:$0xf]
        %v1530 = vld [vmem:[%s1528 + $0x4] sm:$0xf]
        %v1531 = vld [vmem:[%s1528 + $0x8] sm:$0x1]
        %v1532 = vld [vmem:[%s1528 + $0xc] sm:$0xf]
        %v1533 = vld [vmem:[%s1528 + $0x10] sm:$0xf]
        %v1534 = vld [vmem:[%s1528 + $0x14] sm:$0x1]
        %v1535 = vld [vmem:[%s1528 + $0x18] sm:$0xf]
        %v1536 = vld [vmem:[%s1528 + $0x1c] sm:$0xf]
        %v1537 = vld [vmem:[%s1528 + $0x20] sm:$0x1]
        %v1538 = vld [vmem:[%s1528 + $0x24] sm:$0xf]
        %v1539 = vld [vmem:[%s1528 + $0x28] sm:$0xf]
        %v1540 = vld [vmem:[%s1528 + $0x2c] sm:$0x1]
        %v1541 = vld [vmem:[%s1528 + $0x30] sm:$0xf]
        %v1542 = vld [vmem:[%s1528 + $0x34] sm:$0xf]
        %v1543 = vld [vmem:[%s1528 + $0x38] sm:$0x1]
        %v1544 = vld [vmem:[%s1528 + $0x3c] sm:$0xf]
        %v1545 = vld [vmem:[%s1528 + $0x40] sm:$0xf]
        %v1546 = vld [vmem:[%s1528 + $0x44] sm:$0x1]
        %v1547 = vld [vmem:[%s1528 + $0x48] sm:$0xf]
        %v1548 = vld [vmem:[%s1528 + $0x4c] sm:$0xf]
        %v1549 = vld [vmem:[%s1528 + $0x50] sm:$0x1]
        %v1550 = vld [vmem:[%s1528 + $0x54] sm:$0xf]
        %v1551 = vld [vmem:[%s1528 + $0x58] sm:$0xf]
        %v1552 = vld [vmem:[%s1528 + $0x5c] sm:$0x1]
        %v1553 = vld [vmem:[%s1 + $0xc] sm:$0x3]
        %v1570 = vunpack.c.l.b16 %v1529
        %v1571 = vunpack.c.l.b16 %v1530
        %v1572 = vunpack.c.l.b16 %v1532
        %v1573 = vunpack.c.l.b16 %v1533
        %v1574 = vunpack.c.l.b16 %v1535
        %v1575 = vunpack.c.l.b16 %v1536
        %v1576 = vunpack.c.l.b16 %v1538
        %v1577 = vunpack.c.l.b16 %v1539
        %v1578 = vunpack.c.l.b16 %v1541
        %v1579 = vunpack.c.l.b16 %v1542
        %v1580 = vunpack.c.l.b16 %v1544
        %v1581 = vunpack.c.l.b16 %v1545
        %v1582 = vunpack.c.l.b16 %v1547
        %v1583 = vunpack.c.l.b16 %v1548
        %v1584 = vunpack.c.l.b16 %v1550
        %v1585 = vunpack.c.l.b16 %v1551
        %v1586 = vpack.c.b16 %v1571, %v1570
        %v1587 = vpack.c.b16 %v1573, %v1572
        %v1588 = vpack.c.b16 %v1575, %v1574
        %v1589 = vpack.c.b16 %v1577, %v1576
        %v1590 = vpack.c.b16 %v1579, %v1578
        %v1591 = vpack.c.b16 %v1581, %v1580
        %v1592 = vpack.c.b16 %v1583, %v1582
        %v1593 = vpack.c.b16 %v1585, %v1584
        %v1595 = vsel %vm488, %v1586, 0
        %v1598 = vsel %vm488, %v1587, 0
        %v1601 = vsel %vm488, %v1588, 0
        %v1604 = vsel %vm488, %v1589, 0
        %v1607 = vsel %vm488, %v1590, 0
        %v1610 = vsel %vm488, %v1591, 0
        %v1613 = vsel %vm488, %v1592, 0
        %v1616 = vsel %vm488, %v1593, 0
        %v1619 = vsel %vm513, %v1553, 0
        %1621 = vmatpush.bf16.msra.mxu0 0
        %1622 = vmatpush.bf16.msra.mxu0 0
        %1623 = vmatpush.bf16.msra.mxu0 0
        %1624 = vmatpush.bf16.msra.mxu0 0
        %1625 = vmatpush.bf16.msra.mxu0 0
        %1626 = vmatpush.bf16.msra.mxu0 0
        %1627 = vmatpush.bf16.msra.mxu0 0
        %1628 = vmatpush.bf16.msra.mxu0 %v1619
        %1629 = vmatmul.bf16.gmra.mxu0 %v1595
        %v1630 = vpop.f32.mrf.mxu0
        %v1631 = vadd.f32 0.0, %v1630
        %v1632 = vpop.f32.mrf.mxu0
        %v1633 = vadd.f32 0.0, %v1632
        %1634 = vmatmul.bf16.gmra.mxu0 %v1598
        %v1635 = vpop.f32.mrf.mxu0
        %v1636 = vadd.f32 0.0, %v1635
        %v1637 = vpop.f32.mrf.mxu0
        %v1638 = vadd.f32 0.0, %v1637
        %1639 = vmatmul.bf16.gmra.mxu0 %v1601
        %v1640 = vpop.f32.mrf.mxu0
        %v1641 = vadd.f32 0.0, %v1640
        %v1642 = vpop.f32.mrf.mxu0
        %v1643 = vadd.f32 0.0, %v1642
        %1644 = vmatmul.bf16.gmra.mxu0 %v1604
        %v1645 = vpop.f32.mrf.mxu0
        %v1646 = vadd.f32 0.0, %v1645
        %v1647 = vpop.f32.mrf.mxu0
        %v1648 = vadd.f32 0.0, %v1647
        %1649 = vmatmul.bf16.gmra.mxu0 %v1607
        %v1650 = vpop.f32.mrf.mxu0
        %v1651 = vadd.f32 0.0, %v1650
        %v1652 = vpop.f32.mrf.mxu0
        %v1653 = vadd.f32 0.0, %v1652
        %1654 = vmatmul.bf16.gmra.mxu0 %v1610
        %v1655 = vpop.f32.mrf.mxu0
        %v1656 = vadd.f32 0.0, %v1655
        %v1657 = vpop.f32.mrf.mxu0
        %v1658 = vadd.f32 0.0, %v1657
        %1659 = vmatmul.bf16.gmra.mxu0 %v1613
        %v1660 = vpop.f32.mrf.mxu0
        %v1661 = vadd.f32 0.0, %v1660
        %v1662 = vpop.f32.mrf.mxu0
        %v1663 = vadd.f32 0.0, %v1662
        %1664 = vmatmul.bf16.gmra.mxu0 %v1616
        %v1665 = vpop.f32.mrf.mxu0
        %v1666 = vadd.f32 0.0, %v1665
        %v1667 = vpop.f32.mrf.mxu0
        %v1668 = vadd.f32 0.0, %v1667
        %1669 = vdwg.mxu0
        %v1670 = vadd.f32 %v1509, %v1631
        %v1671 = vadd.f32 %v1510, %v1633
        %v1672 = vadd.f32 %v1511, %v1636
        %v1673 = vadd.f32 %v1512, %v1638
        %v1674 = vadd.f32 %v1513, %v1641
        %v1675 = vadd.f32 %v1514, %v1643
        %v1676 = vadd.f32 %v1515, %v1646
        %v1677 = vadd.f32 %v1516, %v1648
        %v1678 = vadd.f32 %v1517, %v1651
        %v1679 = vadd.f32 %v1518, %v1653
        %v1680 = vadd.f32 %v1519, %v1656
        %v1681 = vadd.f32 %v1520, %v1658
        %v1682 = vadd.f32 %v1521, %v1661
        %v1683 = vadd.f32 %v1522, %v1663
        %v1684 = vadd.f32 %v1523, %v1666
        %v1685 = vadd.f32 %v1524, %v1668
        %v1687 = vshrl.u32 %v1529, 16
        %v1689 = vrot.slane %v1687, 4
        %v1690 = vshll.u32 %v1529, 16
        %v1692 = vrot.slane %v1690, 5
        %v1693 = vor.u32 %v1689, %v1692
        %v1694 = vrot.slane %v1693, 4
        %v1696 = vshll.u32 %v1530, 16
        %v1698 = vrot.slane %v1696, 5
        %v1699 = vsel %vm266, %v1694, %v1698
        %v1700 = vshrl.u32 %v1530, 16
        %v1702 = vrot.slane %v1700, 4
        %v1703 = vor.u32 %v1702, %v1698
        %v1704 = vrot.slane %v1703, 4
        %v1706 = vshll.u32 %v1531, 16
        %v1708 = vrot.slane %v1706, 5
        %v1709 = vsel %vm266, %v1704, %v1708
        %v1711 = vshrl.u32 %v1532, 16
        %v1713 = vrot.slane %v1711, 4
        %v1714 = vshll.u32 %v1532, 16
        %v1716 = vrot.slane %v1714, 5
        %v1717 = vor.u32 %v1713, %v1716
        %v1718 = vrot.slane %v1717, 4
        %v1720 = vshll.u32 %v1533, 16
        %v1722 = vrot.slane %v1720, 5
        %v1723 = vsel %vm266, %v1718, %v1722
        %v1724 = vshrl.u32 %v1533, 16
        %v1726 = vrot.slane %v1724, 4
        %v1727 = vor.u32 %v1726, %v1722
        %v1728 = vrot.slane %v1727, 4
        %v1730 = vshll.u32 %v1534, 16
        %v1732 = vrot.slane %v1730, 5
        %v1733 = vsel %vm266, %v1728, %v1732
        %v1735 = vshrl.u32 %v1535, 16
        %v1737 = vrot.slane %v1735, 4
        %v1738 = vshll.u32 %v1535, 16
        %v1740 = vrot.slane %v1738, 5
        %v1741 = vor.u32 %v1737, %v1740
        %v1742 = vrot.slane %v1741, 4
        %v1744 = vshll.u32 %v1536, 16
        %v1746 = vrot.slane %v1744, 5
        %v1747 = vsel %vm266, %v1742, %v1746
        %v1748 = vshrl.u32 %v1536, 16
        %v1750 = vrot.slane %v1748, 4
        %v1751 = vor.u32 %v1750, %v1746
        %v1752 = vrot.slane %v1751, 4
        %v1754 = vshll.u32 %v1537, 16
        %v1756 = vrot.slane %v1754, 5
        %v1757 = vsel %vm266, %v1752, %v1756
        %v1759 = vshrl.u32 %v1538, 16
        %v1761 = vrot.slane %v1759, 4
        %v1762 = vshll.u32 %v1538, 16
        %v1764 = vrot.slane %v1762, 5
        %v1765 = vor.u32 %v1761, %v1764
        %v1766 = vrot.slane %v1765, 4
        %v1768 = vshll.u32 %v1539, 16
        %v1770 = vrot.slane %v1768, 5
        %v1771 = vsel %vm266, %v1766, %v1770
        %v1772 = vshrl.u32 %v1539, 16
        %v1774 = vrot.slane %v1772, 4
        %v1775 = vor.u32 %v1774, %v1770
        %v1776 = vrot.slane %v1775, 4
        %v1778 = vshll.u32 %v1540, 16
        %v1780 = vrot.slane %v1778, 5
        %v1781 = vsel %vm266, %v1776, %v1780
        %v1783 = vshrl.u32 %v1541, 16
        %v1785 = vrot.slane %v1783, 4
        %v1786 = vshll.u32 %v1541, 16
        %v1788 = vrot.slane %v1786, 5
        %v1789 = vor.u32 %v1785, %v1788
        %v1790 = vrot.slane %v1789, 4
        %v1792 = vshll.u32 %v1542, 16
        %v1794 = vrot.slane %v1792, 5
        %v1795 = vsel %vm266, %v1790, %v1794
        %v1796 = vshrl.u32 %v1542, 16
        %v1798 = vrot.slane %v1796, 4
        %v1799 = vor.u32 %v1798, %v1794
        %v1800 = vrot.slane %v1799, 4
        %v1802 = vshll.u32 %v1543, 16
        %v1804 = vrot.slane %v1802, 5
        %v1805 = vsel %vm266, %v1800, %v1804
        %v1807 = vshrl.u32 %v1544, 16
        %v1809 = vrot.slane %v1807, 4
        %v1810 = vshll.u32 %v1544, 16
        %v1812 = vrot.slane %v1810, 5
        %v1813 = vor.u32 %v1809, %v1812
        %v1814 = vrot.slane %v1813, 4
        %v1816 = vshll.u32 %v1545, 16
        %v1818 = vrot.slane %v1816, 5
        %v1819 = vsel %vm266, %v1814, %v1818
        %v1820 = vshrl.u32 %v1545, 16
        %v1822 = vrot.slane %v1820, 4
        %v1823 = vor.u32 %v1822, %v1818
        %v1824 = vrot.slane %v1823, 4
        %v1826 = vshll.u32 %v1546, 16
        %v1828 = vrot.slane %v1826, 5
        %v1829 = vsel %vm266, %v1824, %v1828
        %v1831 = vshrl.u32 %v1547, 16
        %v1833 = vrot.slane %v1831, 4
        %v1834 = vshll.u32 %v1547, 16
        %v1836 = vrot.slane %v1834, 5
        %v1837 = vor.u32 %v1833, %v1836
        %v1838 = vrot.slane %v1837, 4
        %v1840 = vshll.u32 %v1548, 16
        %v1842 = vrot.slane %v1840, 5
        %v1843 = vsel %vm266, %v1838, %v1842
        %v1844 = vshrl.u32 %v1548, 16
        %v1846 = vrot.slane %v1844, 4
        %v1847 = vor.u32 %v1846, %v1842
        %v1848 = vrot.slane %v1847, 4
        %v1850 = vshll.u32 %v1549, 16
        %v1852 = vrot.slane %v1850, 5
        %v1853 = vsel %vm266, %v1848, %v1852
        %v1855 = vshrl.u32 %v1550, 16
        %v1857 = vrot.slane %v1855, 4
        %v1858 = vshll.u32 %v1550, 16
        %v1860 = vrot.slane %v1858, 5
        %v1861 = vor.u32 %v1857, %v1860
        %v1862 = vrot.slane %v1861, 4
        %v1864 = vshll.u32 %v1551, 16
        %v1866 = vrot.slane %v1864, 5
        %v1867 = vsel %vm266, %v1862, %v1866
        %v1868 = vshrl.u32 %v1551, 16
        %v1870 = vrot.slane %v1868, 4
        %v1871 = vor.u32 %v1870, %v1866
        %v1872 = vrot.slane %v1871, 4
        %v1874 = vshll.u32 %v1552, 16
        %v1876 = vrot.slane %v1874, 5
        %v1877 = vsel %vm266, %v1872, %v1876
        %v1878 = vld [vmem:[%s1 + $0xc] sm:$0xc]
        %v1879 = vunpack.c.l.b16 %v1699
        %v1880 = vunpack.c.l.b16 %v1709
        %v1881 = vunpack.c.l.b16 %v1723
        %v1882 = vunpack.c.l.b16 %v1733
        %v1883 = vunpack.c.l.b16 %v1747
        %v1884 = vunpack.c.l.b16 %v1757
        %v1885 = vunpack.c.l.b16 %v1771
        %v1886 = vunpack.c.l.b16 %v1781
        %v1887 = vunpack.c.l.b16 %v1795
        %v1888 = vunpack.c.l.b16 %v1805
        %v1889 = vunpack.c.l.b16 %v1819
        %v1890 = vunpack.c.l.b16 %v1829
        %v1891 = vunpack.c.l.b16 %v1843
        %v1892 = vunpack.c.l.b16 %v1853
        %v1893 = vunpack.c.l.b16 %v1867
        %v1894 = vunpack.c.l.b16 %v1877
        %v1895 = vpack.c.b16 %v1880, %v1879
        %v1896 = vpack.c.b16 %v1882, %v1881
        %v1897 = vpack.c.b16 %v1884, %v1883
        %v1898 = vpack.c.b16 %v1886, %v1885
        %v1899 = vpack.c.b16 %v1888, %v1887
        %v1900 = vpack.c.b16 %v1890, %v1889
        %v1901 = vpack.c.b16 %v1892, %v1891
        %v1902 = vpack.c.b16 %v1894, %v1893
        %v1904 = vunpack.c.l.b16 %v1878
        %v1905 = vpack.c.b16 %v1904, %v1904
        %v1906 = vrot.slane %v1905, 2
        %v1908 = vsel %vm488, %v1895, 0
        %v1911 = vsel %vm488, %v1896, 0
        %v1914 = vsel %vm488, %v1897, 0
        %v1917 = vsel %vm488, %v1898, 0
        %v1920 = vsel %vm488, %v1899, 0
        %v1923 = vsel %vm488, %v1900, 0
        %v1926 = vsel %vm488, %v1901, 0
        %v1929 = vsel %vm488, %v1902, 0
        %v1932 = vsel %vm513, %v1906, 0
        %1934 = vmatpush.bf16.msra.mxu0 0
        %1935 = vmatpush.bf16.msra.mxu0 0
        %1936 = vmatpush.bf16.msra.mxu0 0
        %1937 = vmatpush.bf16.msra.mxu0 0
        %1938 = vmatpush.bf16.msra.mxu0 0
        %1939 = vmatpush.bf16.msra.mxu0 0
        %1940 = vmatpush.bf16.msra.mxu0 0
        %1941 = vmatpush.bf16.msra.mxu0 %v1932
        %1942 = vmatmul.bf16.gmra.mxu0 %v1908
        %v1943 = vpop.f32.mrf.mxu0
        %v1944 = vadd.f32 0.0, %v1943
        %v1945 = vpop.f32.mrf.mxu0
        %v1946 = vadd.f32 0.0, %v1945
        %1947 = vmatmul.bf16.gmra.mxu0 %v1911
        %v1948 = vpop.f32.mrf.mxu0
        %v1949 = vadd.f32 0.0, %v1948
        %v1950 = vpop.f32.mrf.mxu0
        %v1951 = vadd.f32 0.0, %v1950
        %1952 = vmatmul.bf16.gmra.mxu0 %v1914
        %v1953 = vpop.f32.mrf.mxu0
        %v1954 = vadd.f32 0.0, %v1953
        %v1955 = vpop.f32.mrf.mxu0
        %v1956 = vadd.f32 0.0, %v1955
        %1957 = vmatmul.bf16.gmra.mxu0 %v1917
        %v1958 = vpop.f32.mrf.mxu0
        %v1959 = vadd.f32 0.0, %v1958
        %v1960 = vpop.f32.mrf.mxu0
        %v1961 = vadd.f32 0.0, %v1960
        %1962 = vmatmul.bf16.gmra.mxu0 %v1920
        %v1963 = vpop.f32.mrf.mxu0
        %v1964 = vadd.f32 0.0, %v1963
        %v1965 = vpop.f32.mrf.mxu0
        %v1966 = vadd.f32 0.0, %v1965
        %1967 = vmatmul.bf16.gmra.mxu0 %v1923
        %v1968 = vpop.f32.mrf.mxu0
        %v1969 = vadd.f32 0.0, %v1968
        %v1970 = vpop.f32.mrf.mxu0
        %v1971 = vadd.f32 0.0, %v1970
        %1972 = vmatmul.bf16.gmra.mxu0 %v1926
        %v1973 = vpop.f32.mrf.mxu0
        %v1974 = vadd.f32 0.0, %v1973
        %v1975 = vpop.f32.mrf.mxu0
        %v1976 = vadd.f32 0.0, %v1975
        %1977 = vmatmul.bf16.gmra.mxu0 %v1929
        %v1978 = vpop.f32.mrf.mxu0
        %v1979 = vadd.f32 0.0, %v1978
        %v1980 = vpop.f32.mrf.mxu0
        %v1981 = vadd.f32 0.0, %v1980
        %1982 = vdwg.mxu0
        %v1983 = vadd.f32 %v1670, %v1944
        %v1984 = vadd.f32 %v1671, %v1946
        %v1985 = vadd.f32 %v1672, %v1949
        %v1986 = vadd.f32 %v1673, %v1951
        %v1987 = vadd.f32 %v1674, %v1954
        %v1988 = vadd.f32 %v1675, %v1956
        %v1989 = vadd.f32 %v1676, %v1959
        %v1990 = vadd.f32 %v1677, %v1961
        %v1991 = vadd.f32 %v1678, %v1964
        %v1992 = vadd.f32 %v1679, %v1966
        %v1993 = vadd.f32 %v1680, %v1969
        %v1994 = vadd.f32 %v1681, %v1971
        %v1995 = vadd.f32 %v1682, %v1974
        %v1996 = vadd.f32 %v1683, %v1976
        %v1997 = vadd.f32 %v1684, %v1979
        %v1998 = vadd.f32 %v1685, %v1981
        %v2007 = vrot.slane %v1529, 5
        %v2008 = vrot.slane %v2007, 4
        %v2009 = vrot.slane %v1530, 5
        %v2010 = vsel %vm692, %v2008, %v2009
        %v2011 = vrot.slane %v2009, 4
        %v2012 = vrot.slane %v1531, 5
        %v2013 = vsel %vm692, %v2011, %v2012
        %v2014 = vrot.slane %v1532, 5
        %v2015 = vrot.slane %v2014, 4
        %v2016 = vrot.slane %v1533, 5
        %v2017 = vsel %vm692, %v2015, %v2016
        %v2018 = vrot.slane %v2016, 4
        %v2019 = vrot.slane %v1534, 5
        %v2020 = vsel %vm692, %v2018, %v2019
        %v2021 = vrot.slane %v1535, 5
        %v2022 = vrot.slane %v2021, 4
        %v2023 = vrot.slane %v1536, 5
        %v2024 = vsel %vm692, %v2022, %v2023
        %v2025 = vrot.slane %v2023, 4
        %v2026 = vrot.slane %v1537, 5
        %v2027 = vsel %vm692, %v2025, %v2026
        %v2028 = vrot.slane %v1538, 5
        %v2029 = vrot.slane %v2028, 4
        %v2030 = vrot.slane %v1539, 5
        %v2031 = vsel %vm692, %v2029, %v2030
        %v2032 = vrot.slane %v2030, 4
        %v2033 = vrot.slane %v1540, 5
        %v2034 = vsel %vm692, %v2032, %v2033
        %v2035 = vrot.slane %v1541, 5
        %v2036 = vrot.slane %v2035, 4
        %v2037 = vrot.slane %v1542, 5
        %v2038 = vsel %vm692, %v2036, %v2037
        %v2039 = vrot.slane %v2037, 4
        %v2040 = vrot.slane %v1543, 5
        %v2041 = vsel %vm692, %v2039, %v2040
        %v2042 = vrot.slane %v1544, 5
        %v2043 = vrot.slane %v2042, 4
        %v2044 = vrot.slane %v1545, 5
        %v2045 = vsel %vm692, %v2043, %v2044
        %v2046 = vrot.slane %v2044, 4
        %v2047 = vrot.slane %v1546, 5
        %v2048 = vsel %vm692, %v2046, %v2047
        %v2049 = vrot.slane %v1547, 5
        %v2050 = vrot.slane %v2049, 4
        %v2051 = vrot.slane %v1548, 5
        %v2052 = vsel %vm692, %v2050, %v2051
        %v2053 = vrot.slane %v2051, 4
        %v2054 = vrot.slane %v1549, 5
        %v2055 = vsel %vm692, %v2053, %v2054
        %v2056 = vrot.slane %v1550, 5
        %v2057 = vrot.slane %v2056, 4
        %v2058 = vrot.slane %v1551, 5
        %v2059 = vsel %vm692, %v2057, %v2058
        %v2060 = vrot.slane %v2058, 4
        %v2061 = vrot.slane %v1552, 5
        %v2062 = vsel %vm692, %v2060, %v2061
        %v2063 = vld [vmem:[%s1 + $0x10] sm:$0x3]
        %v2064 = vunpack.c.l.b16 %v2010
        %v2065 = vunpack.c.l.b16 %v2013
        %v2066 = vunpack.c.l.b16 %v2017
        %v2067 = vunpack.c.l.b16 %v2020
        %v2068 = vunpack.c.l.b16 %v2024
        %v2069 = vunpack.c.l.b16 %v2027
        %v2070 = vunpack.c.l.b16 %v2031
        %v2071 = vunpack.c.l.b16 %v2034
        %v2072 = vunpack.c.l.b16 %v2038
        %v2073 = vunpack.c.l.b16 %v2041
        %v2074 = vunpack.c.l.b16 %v2045
        %v2075 = vunpack.c.l.b16 %v2048
        %v2076 = vunpack.c.l.b16 %v2052
        %v2077 = vunpack.c.l.b16 %v2055
        %v2078 = vunpack.c.l.b16 %v2059
        %v2079 = vunpack.c.l.b16 %v2062
        %v2080 = vpack.c.b16 %v2065, %v2064
        %v2081 = vpack.c.b16 %v2067, %v2066
        %v2082 = vpack.c.b16 %v2069, %v2068
        %v2083 = vpack.c.b16 %v2071, %v2070
        %v2084 = vpack.c.b16 %v2073, %v2072
        %v2085 = vpack.c.b16 %v2075, %v2074
        %v2086 = vpack.c.b16 %v2077, %v2076
        %v2087 = vpack.c.b16 %v2079, %v2078
        %v2089 = vsel %vm488, %v2080, 0
        %v2092 = vsel %vm488, %v2081, 0
        %v2095 = vsel %vm488, %v2082, 0
        %v2098 = vsel %vm488, %v2083, 0
        %v2101 = vsel %vm488, %v2084, 0
        %v2104 = vsel %vm488, %v2085, 0
        %v2107 = vsel %vm488, %v2086, 0
        %v2110 = vsel %vm488, %v2087, 0
        %v2113 = vsel %vm513, %v2063, 0
        %2115 = vmatpush.bf16.msra.mxu0 0
        %2116 = vmatpush.bf16.msra.mxu0 0
        %2117 = vmatpush.bf16.msra.mxu0 0
        %2118 = vmatpush.bf16.msra.mxu0 0
        %2119 = vmatpush.bf16.msra.mxu0 0
        %2120 = vmatpush.bf16.msra.mxu0 0
        %2121 = vmatpush.bf16.msra.mxu0 0
        %2122 = vmatpush.bf16.msra.mxu0 %v2113
        %2123 = vmatmul.bf16.gmra.mxu0 %v2089
        %v2124 = vpop.f32.mrf.mxu0
        %v2125 = vadd.f32 0.0, %v2124
        %v2126 = vpop.f32.mrf.mxu0
        %v2127 = vadd.f32 0.0, %v2126
        %2128 = vmatmul.bf16.gmra.mxu0 %v2092
        %v2129 = vpop.f32.mrf.mxu0
        %v2130 = vadd.f32 0.0, %v2129
        %v2131 = vpop.f32.mrf.mxu0
        %v2132 = vadd.f32 0.0, %v2131
        %2133 = vmatmul.bf16.gmra.mxu0 %v2095
        %v2134 = vpop.f32.mrf.mxu0
        %v2135 = vadd.f32 0.0, %v2134
        %v2136 = vpop.f32.mrf.mxu0
        %v2137 = vadd.f32 0.0, %v2136
        %2138 = vmatmul.bf16.gmra.mxu0 %v2098
        %v2139 = vpop.f32.mrf.mxu0
        %v2140 = vadd.f32 0.0, %v2139
        %v2141 = vpop.f32.mrf.mxu0
        %v2142 = vadd.f32 0.0, %v2141
        %2143 = vmatmul.bf16.gmra.mxu0 %v2101
        %v2144 = vpop.f32.mrf.mxu0
        %v2145 = vadd.f32 0.0, %v2144
        %v2146 = vpop.f32.mrf.mxu0
        %v2147 = vadd.f32 0.0, %v2146
        %2148 = vmatmul.bf16.gmra.mxu0 %v2104
        %v2149 = vpop.f32.mrf.mxu0
        %v2150 = vadd.f32 0.0, %v2149
        %v2151 = vpop.f32.mrf.mxu0
        %v2152 = vadd.f32 0.0, %v2151
        %2153 = vmatmul.bf16.gmra.mxu0 %v2107
        %v2154 = vpop.f32.mrf.mxu0
        %v2155 = vadd.f32 0.0, %v2154
        %v2156 = vpop.f32.mrf.mxu0
        %v2157 = vadd.f32 0.0, %v2156
        %2158 = vmatmul.bf16.gmra.mxu0 %v2110
        %v2159 = vpop.f32.mrf.mxu0
        %v2160 = vadd.f32 0.0, %v2159
        %v2161 = vpop.f32.mrf.mxu0
        %v2162 = vadd.f32 0.0, %v2161
        %2163 = vdwg.mxu0
        %v2164 = vadd.f32 %v1983, %v2125
        %v2165 = vadd.f32 %v1984, %v2127
        %v2166 = vadd.f32 %v1985, %v2130
        %v2167 = vadd.f32 %v1986, %v2132
        %v2168 = vadd.f32 %v1987, %v2135
        %v2169 = vadd.f32 %v1988, %v2137
        %v2170 = vadd.f32 %v1989, %v2140
        %v2171 = vadd.f32 %v1990, %v2142
        %v2172 = vadd.f32 %v1991, %v2145
        %v2173 = vadd.f32 %v1992, %v2147
        %v2174 = vadd.f32 %v1993, %v2150
        %v2175 = vadd.f32 %v1994, %v2152
        %v2176 = vadd.f32 %v1995, %v2155
        %v2177 = vadd.f32 %v1996, %v2157
        %v2178 = vadd.f32 %v1997, %v2160
        %v2179 = vadd.f32 %v1998, %v2162
        %v2181 = vperm.slane %v227, 0
        %v2183 = vmul.f32 %v2164, %v2181
        %v2184 = vmul.f32 %v2165, %v2181
        %v2185 = vmul.f32 %v2166, %v2181
        %v2186 = vmul.f32 %v2167, %v2181
        %v2187 = vmul.f32 %v2168, %v2181
        %v2188 = vmul.f32 %v2169, %v2181
        %v2189 = vmul.f32 %v2170, %v2181
        %v2190 = vmul.f32 %v2171, %v2181
        %v2191 = vmul.f32 %v2172, %v2181
        %v2192 = vmul.f32 %v2173, %v2181
        %v2193 = vmul.f32 %v2174, %v2181
        %v2194 = vmul.f32 %v2175, %v2181
        %v2195 = vmul.f32 %v2176, %v2181
        %v2196 = vmul.f32 %v2177, %v2181
        %v2197 = vmul.f32 %v2178, %v2181
        %v2198 = vmul.f32 %v2179, %v2181
        %v2200 = vperm.slane %v228, 0
        %v2202 = vadd.f32 %v2183, %v2200
        %v2203 = vadd.f32 %v2184, %v2200
        %v2204 = vadd.f32 %v2185, %v2200
        %v2205 = vadd.f32 %v2186, %v2200
        %v2206 = vadd.f32 %v2187, %v2200
        %v2207 = vadd.f32 %v2188, %v2200
        %v2208 = vadd.f32 %v2189, %v2200
        %v2209 = vadd.f32 %v2190, %v2200
        %v2210 = vadd.f32 %v2191, %v2200
        %v2211 = vadd.f32 %v2192, %v2200
        %v2212 = vadd.f32 %v2193, %v2200
        %v2213 = vadd.f32 %v2194, %v2200
        %v2214 = vadd.f32 %v2195, %v2200
        %v2215 = vadd.f32 %v2196, %v2200
        %v2216 = vadd.f32 %v2197, %v2200
        %v2217 = vadd.f32 %v2198, %v2200
        %v2218 = vmax.f32 %v2202, 0.0
        %v2219 = vmax.f32 %v2203, 0.0
        %v2220 = vmax.f32 %v2204, 0.0
        %v2221 = vmax.f32 %v2205, 0.0
        %v2222 = vmax.f32 %v2206, 0.0
        %v2223 = vmax.f32 %v2207, 0.0
        %v2224 = vmax.f32 %v2208, 0.0
        %v2225 = vmax.f32 %v2209, 0.0
        %v2226 = vmax.f32 %v2210, 0.0
        %v2227 = vmax.f32 %v2211, 0.0
        %v2228 = vmax.f32 %v2212, 0.0
        %v2229 = vmax.f32 %v2213, 0.0
        %v2230 = vmax.f32 %v2214, 0.0
        %v2231 = vmax.f32 %v2215, 0.0
        %v2232 = vmax.f32 %v2216, 0.0
        %v2233 = vmax.f32 %v2217, 0.0
        %2234 = vxpose.xlu0.b32.start [1/16] %v2218, 128
        %2235 = vxpose.xlu0.b32.cont [2/16] %v2219, 128
        %2236 = vxpose.xlu0.b32.cont [3/16] %v2220, 128
        %2237 = vxpose.xlu0.b32.cont [4/16] %v2221, 128
        %2238 = vxpose.xlu0.b32.cont [5/16] %v2222, 128
        %2239 = vxpose.xlu0.b32.cont [6/16] %v2223, 128
        %2240 = vxpose.xlu0.b32.cont [7/16] %v2224, 128
        %2241 = vxpose.xlu0.b32.cont [8/16] %v2225, 128
        %2242 = vxpose.xlu0.b32.cont [9/16] %v2226, 128
        %2243 = vxpose.xlu0.b32.cont [10/16] %v2227, 128
        %2244 = vxpose.xlu0.b32.cont [11/16] %v2228, 128
        %2245 = vxpose.xlu0.b32.cont [12/16] %v2229, 128
        %2246 = vxpose.xlu0.b32.cont [13/16] %v2230, 128
        %2247 = vxpose.xlu0.b32.cont [14/16] %v2231, 128
        %2248 = vxpose.xlu0.b32.cont [15/16] %v2232, 128
        %2249 = vxpose.xlu0.b32.end [16/16] %v2233, 128
        %v2250 = vpop.trf.xlu0
        %v2251 = vpop.trf.xlu0
        %v2252 = vpop.trf.xlu0
        %v2253 = vpop.trf.xlu0
        %v2254 = vpop.trf.xlu0
        %v2255 = vpop.trf.xlu0
        %v2256 = vpop.trf.xlu0
        %v2257 = vpop.trf.xlu0
        %v2258 = vpop.trf.xlu0
        %v2259 = vpop.trf.xlu0
        %v2260 = vpop.trf.xlu0
        %v2261 = vpop.trf.xlu0
        %v2262 = vpop.trf.xlu0
        %v2263 = vpop.trf.xlu0
        %v2264 = vpop.trf.xlu0
        %v2265 = vpop.trf.xlu0
        %s2266 = smul.u32 %s230, 128
        %s2267 = sshra.s32 %s2266, 7
        %s2268 = sand.u32 %s2266, 127
        %s2269 = smul.addr %s2267, 8
        %s2270 = scalar_lea.vmem %s225, %s2269
        %2271 = vst [vmem:[%s2270] sm:$0xff] %v2250
      $region41: #{fbs_forward.3} parent=35 // loop_footer
        %s234 = sadd.s32 1, %s230
      $region42: #{fbs_forward.3} parent=35 // loop_footer_branch
        %229 = sbr.rel target = $region38
      $region43: #{fbs_forward.3} parent=35 // loop_exit
        _
      %p2272 = scmp.lt.s32.totalorder %s15, 1
      %s2273 = scalar_select %p2272, %s15, 1
      %s2274 = smul.addr %s2273, 2
      %s2275 = smul.addr %s2274, 8
      %s2276 = scalar_lea.vmem %s4, %s2275
      // Predicated region
      $region44: #{fbs_forward.3} parent=35 // pred_check
        %p2277 = pneg %p132
      $region45: #{fbs_forward.3} parent=35 // pred_check_branch
        %2279 = sbr.rel (%p2277) target = $region47
      $region46: #{fbs_forward.3} parent=35 // pred_region
        _
      $region47: #{fbs_forward.3} parent=35 // pred_fallthru
        _
    $region36: #{fbs_forward.3} parent=5 // pred_fallthru
      _
    %p2280 = scmp.le.s32.totalorder 2, %s10
    // Predicated region
    $region48: #{fbs_forward.3} parent=5 // pred_check
      %p2281 = pneg %p2280
    $region49: #{fbs_forward.3} parent=5 // pred_check_branch
      %2283 = sbr.rel (%p2281) target = $region51
    $region50: #{fbs_forward.3} parent=5 // pred_region
      %s2284 = ssub.s32 %s10, 2
      // Predicated region
      $region52: #{fbs_forward.3} parent=50 // pred_check
        %p2285 = pneg %p138
      $region53: #{fbs_forward.3} parent=50 // pred_check_branch
        %2287 = sbr.rel (%p2285) target = $region55
      $region54: #{fbs_forward.3} parent=50 // pred_region
        %p2288 = scmp.lt.s32.totalorder %s16, 1
        %s2289 = scalar_select %p2288, %s16, 1
        %s2290 = smul.addr %s2289, 2
        %s2291 = smul.addr %s2290, 8
        %s2292 = scalar_lea.vmem %s4, %s2291
      $region55: #{fbs_forward.3} parent=50 // pred_fallthru
        _
    $region51: #{fbs_forward.3} parent=5 // pred_fallthru
      _
  $region6: #{fbs_forward.3} parent=0 // loop_footer
    %s14 = sadd.s32 1, %s10
  $region7: #{fbs_forward.3} parent=0 // loop_footer_branch
    %9 = sbr.rel target = $region3
  $region8: #{fbs_forward.3} parent=0 // loop_exit
    _

</llo_original>
